<compile_context>
chip_gen: v7x
topology: tpu7x:2x2x1
jax: 0.10.0
libtpu: 0.0.40
codegen_flags: <defaults>
</compile_context>

<pallas_src>
import math

import jax
import jax.numpy as jnp
from jax.experimental import pallas as pl
from jax.experimental.pallas import tpu as pltpu


def _round_up(x, m):
    return ((x + m - 1) // m) * m


def gcn_kernel(a_ref, hs_ref, hd_ref, w_ref, b_ref, o_ref, acc_ref, deg_ref):
    """Grid = (row_tiles, k_tiles); K (source-node reduction) is the last axis."""
    k = pl.program_id(1)

    @pl.when(k == 0)
    def _init():
        acc_ref[...] = jnp.zeros_like(acc_ref)
        deg_ref[...] = jnp.zeros_like(deg_ref)

    # bf16 {0,1} adjacency -> exact f32; reuse for both the matmul and the
    # in-degree partial sum so A is touched once per tile.
    a = a_ref[...].astype(jnp.float32)                                   # [tm, tk]
    acc_ref[...] += jnp.dot(a, hs_ref[...],
                            preferred_element_type=jnp.float32)          # [tm, Fin]
    deg_ref[...] += jnp.sum(a, axis=-1, keepdims=True)                   # [tm, 1]

    @pl.when(k == pl.num_programs(1) - 1)
    def _finalize():
        deg = deg_ref[...]
        # approx=False keeps exact parity with the f32 reference; approx=True
        # would put the reciprocal on the EUP slot at ~1e-3 relative error.
        inv = pl.reciprocal(jnp.maximum(deg, 1.0), approx=False)
        # DGL semantics: degree-0 nodes keep their original feature.
        h_agg = jnp.where(deg > 0.0, acc_ref[...] * inv, hd_ref[...])    # [tm, Fin]
        z = jnp.dot(h_agg, w_ref[...],
                    preferred_element_type=jnp.float32) + b_ref[...]     # [tm, Fout_pad]
        o_ref[...] = jnp.maximum(z, 0.0)


def gcn_forward(adj, feature, weight, bias, *, tm=256, tk=512):
    """adj [N,N], feature [N,Fin], weight [Fout,Fin] (torch layout), bias [Fout]."""
    n, f_in = feature.shape
    f_out = weight.shape[0]

    # ---- tile sizing (clamped to the problem size, hardware-granular) ------
    tk = max(128, min(tk, _round_up(n, 128)))   # reduction tile (A columns)
    tm = max(8, min(tm, _round_up(n, 8), tk))   # destination-row tile
    n_pad = _round_up(n, math.lcm(tm, tk))      # pad N so both tiles divide
    f_out_pad = _round_up(f_out, 128)           # lane-dense output stores

    grid = (n_pad // tm, n_pad // tk)

    # ---- operand prep: padding + dtype --------------------------------------
    # Adjacency in bf16: values are exactly 0/1 so the cast is lossless and
    # halves the dominant (N^2) HBM/VMEM footprint.
    a = jnp.zeros((n_pad, n_pad), jnp.bfloat16).at[:n, :n].set(
        adj.astype(jnp.bfloat16))
    h = jnp.zeros((n_pad, f_in), jnp.float32).at[:n, :].set(
        feature.astype(jnp.float32))
    w = jnp.zeros((f_in, f_out_pad), jnp.float32).at[:, :f_out].set(
        weight.T.astype(jnp.float32))
    b = jnp.zeros((1, f_out_pad), jnp.float32).at[:, :f_out].set(
        bias.astype(jnp.float32)[None, :])

    # ---- VMEM budget from tile arithmetic (double-buffered inputs/outputs) --
    vmem_bytes = (
        2 * tm * tk * 2              # A tile (bf16), 2 buffers
        + 2 * tk * f_in * 4          # h source tile
        + 2 * tm * f_in * 4          # h destination-fallback tile
        + 2 * f_in * f_out_pad * 4   # W (resident)
        + 2 * f_out_pad * 4          # bias (resident)
        + 2 * tm * f_out_pad * 4     # output tile
        + tm * f_in * 4              # A@h accumulator scratch
        + tm * 128 * 4               # in-degree scratch (lane-padded)
    )
    vmem_limit = int(min(100 * 1024 * 1024,
                         max(32 * 1024 * 1024, 2 * vmem_bytes)))

    out = pl.pallas_call(
        gcn_kernel,
        out_shape=jax.ShapeDtypeStruct((n_pad, f_out_pad), jnp.float32),
        grid_spec=pltpu.PrefetchScalarGridSpec(
            num_scalar_prefetch=0,
            grid=grid,
            in_specs=[
                pl.BlockSpec((tm, tk), lambda i, k: (i, k)),          # A tile
                pl.BlockSpec((tk, f_in), lambda i, k: (k, 0)),        # h (source, K-tiled)
                pl.BlockSpec((tm, f_in), lambda i, k: (i, 0)),        # h (dest fallback)
                pl.BlockSpec((f_in, f_out_pad), lambda i, k: (0, 0)), # W (resident)
                pl.BlockSpec((1, f_out_pad), lambda i, k: (0, 0)),    # bias (resident)
            ],
            out_specs=pl.BlockSpec((tm, f_out_pad), lambda i, k: (i, 0)),
            scratch_shapes=[
                pltpu.VMEM((tm, f_in), jnp.float32),   # A@h accumulator
                pltpu.VMEM((tm, 1), jnp.float32),      # in-degree accumulator
            ],
        ),
        compiler_params=pltpu.CompilerParams(
            dimension_semantics=("parallel", "arbitrary"),
            vmem_limit_bytes=vmem_limit,
        ),
    )(a, h, h, w, b)

    return out[:n, :f_out]


def reference_gcn(adj, feature, weight, bias):
    deg = jnp.sum(adj, axis=-1, keepdims=True)
    agg = adj @ feature
    h_agg = jnp.where(deg > 0.0, agg / jnp.maximum(deg, 1.0), feature)
    return jnp.maximum(h_agg @ weight.T + bias[None, :], 0.0)


if __name__ == "__main__":
    key = jax.random.PRNGKey(0)
    k_feat, k_adj, k_w, k_b = jax.random.split(key, 4)

    # Small but grid-exercising shapes: 3x3 grid with tm=tk=128.
    N, F_IN, F_OUT = 384, 64, 32

    feature = jax.random.normal(k_feat, (N, F_IN), dtype=jnp.float32)

    # deterministic random directed graph; zero out one node's in-edges to
    # exercise the degree-0 fallback path
    adj = (jax.random.uniform(k_adj, (N, N)) < 0.05).astype(jnp.float32)
    adj = adj * (1.0 - jnp.eye(N, dtype=jnp.float32))   # no self loops
    adj = adj.at[3, :].set(0.0)                          # node 3 has no in-neighbors

    # torch nn.Linear-style init: U(-1/sqrt(in), 1/sqrt(in))
    bound = 1.0 / jnp.sqrt(jnp.float32(F_IN))
    weight = jax.random.uniform(k_w, (F_OUT, F_IN), minval=-bound, maxval=bound,
                                dtype=jnp.float32)
    bias = jax.random.uniform(k_b, (F_OUT,), minval=-bound, maxval=bound,
                              dtype=jnp.float32)

    out = gcn_forward(adj, feature, weight, bias, tm=128, tk=128)
    out = jax.block_until_ready(out)

    ref = reference_gcn(adj, feature, weight, bias)
    assert out.shape == (N, F_OUT)
    assert jnp.allclose(out, ref, atol=1e-4, rtol=1e-4), "mismatch vs reference"

    print("KERNEL_OK")
</pallas_src>

<mosaic_0001>
module attributes {stable_mosaic.version = 11 : i64} {
  func.func @gcn_kernel(%arg0: i32, %arg1: i32, %arg2: memref<128x128xbf16, #tpu.memory_space<vmem>>, %arg3: memref<128x64xf32, #tpu.memory_space<vmem>>, %arg4: memref<128x64xf32, #tpu.memory_space<vmem>>, %arg5: memref<64x128xf32, #tpu.memory_space<vmem>>, %arg6: memref<1x128xf32, #tpu.memory_space<vmem>>, %arg7: memref<128x128xf32, #tpu.memory_space<vmem>>, %arg8: memref<128x64xf32, #tpu.memory_space<vmem>>, %arg9: memref<128x1xf32, #tpu.memory_space<vmem>>) attributes {dimension_semantics = [#tpu.dimension_semantics<parallel>, #tpu.dimension_semantics<arbitrary>], iteration_bounds = array<i64: 3, 3>, scalar_prefetch = 0 : i64, scratch_operands = 2 : i64, tpu.core_type = #tpu.core_type<tc>, window_params = [{transform_indices = @transform_0, window_bounds = array<i64: 128, 128>}, {transform_indices = @transform_1, window_bounds = array<i64: 128, 64>}, {transform_indices = @transform_2, window_bounds = array<i64: 128, 64>}, {pipeline_mode = #tpu.pipeline_mode<synchronous>, transform_indices = @transform_3, window_bounds = array<i64: 64, 128>}, {pipeline_mode = #tpu.pipeline_mode<synchronous>, transform_indices = @transform_4, window_bounds = array<i64: 1, 128>}, {transform_indices = @transform_5, window_bounds = array<i64: 128, 128>}]} {
    %c0_i32 = arith.constant 0 : i32
    %0 = arith.cmpi eq, %arg1, %c0_i32 : i32
    %1 = arith.extui %0 : i1 to i32
    %c0_i32_0 = arith.constant 0 : i32
    %2 = arith.cmpi ne, %1, %c0_i32_0 : i32
    scf.if %2 {
      %cst_14 = arith.constant 0.000000e+00 : f32
      %18 = vector.broadcast %cst_14 : f32 to vector<128x64xf32>
      %c0_15 = arith.constant 0 : index
      %c0_16 = arith.constant 0 : index
      %19 = vector.load %arg8[%c0_15, %c0_16] : memref<128x64xf32, #tpu.memory_space<vmem>>, vector<128x64xf32>
      tpu.vector_store %arg8[%c0_15, %c0_16], %18 {strides = array<i32>} : memref<128x64xf32, #tpu.memory_space<vmem>>, vector<128x64xf32>,
      %cst_17 = arith.constant 0.000000e+00 : f32
      %20 = vector.broadcast %cst_17 : f32 to vector<128x1xf32>
      %c0_18 = arith.constant 0 : index
      %c0_19 = arith.constant 0 : index
      %21 = vector.load %arg9[%c0_18, %c0_19] : memref<128x1xf32, #tpu.memory_space<vmem>>, vector<128x1xf32>
      tpu.vector_store %arg9[%c0_18, %c0_19], %20 {strides = array<i32>} : memref<128x1xf32, #tpu.memory_space<vmem>>, vector<128x1xf32>,
    } else {
    }
    %c0 = arith.constant 0 : index
    %c0_1 = arith.constant 0 : index
    %3 = vector.load %arg2[%c0, %c0_1] : memref<128x128xbf16, #tpu.memory_space<vmem>>, vector<128x128xbf16>
    %4 = arith.extf %3 : vector<128x128xbf16> to vector<128x128xf32>
    %c0_2 = arith.constant 0 : index
    %c0_3 = arith.constant 0 : index
    %5 = vector.load %arg8[%c0_2, %c0_3] : memref<128x64xf32, #tpu.memory_space<vmem>>, vector<128x64xf32>
    %c0_4 = arith.constant 0 : index
    %c0_5 = arith.constant 0 : index
    %6 = vector.load %arg3[%c0_4, %c0_5] : memref<128x64xf32, #tpu.memory_space<vmem>>, vector<128x64xf32>
    %cst = arith.constant dense<0.000000e+00> : vector<128x64xf32>
    %7 = tpu.matmul %4, %6, %cst {dimension_numbers = #tpu.dot_dimension_numbers<[1], [0], [0], [1], [0, 0, 1, 1], [], []>} : vector<128x128xf32>, vector<128x64xf32>, vector<128x64xf32> -> vector<128x64xf32>
    %8 = arith.addf %5, %7 : vector<128x64xf32>
    %c0_6 = arith.constant 0 : index
    %c0_7 = arith.constant 0 : index
    %9 = vector.load %arg8[%c0_6, %c0_7] : memref<128x64xf32, #tpu.memory_space<vmem>>, vector<128x64xf32>
    tpu.vector_store %arg8[%c0_6, %c0_7], %8 {strides = array<i32>} : memref<128x64xf32, #tpu.memory_space<vmem>>, vector<128x64xf32>,
    %c0_8 = arith.constant 0 : index
    %c0_9 = arith.constant 0 : index
    %10 = vector.load %arg9[%c0_8, %c0_9] : memref<128x1xf32, #tpu.memory_space<vmem>>, vector<128x1xf32>
    %cst_10 = arith.constant dense<0.000000e+00> : vector<128xf32>
    %11 = vector.multi_reduction <add>, %4, %cst_10 [1] : vector<128x128xf32> to vector<128xf32>
    %12 = vector.shape_cast %11 : vector<128xf32> to vector<128x1xf32>
    %13 = arith.addf %10, %12 : vector<128x1xf32>
    %c0_11 = arith.constant 0 : index
    %c0_12 = arith.constant 0 : index
    %14 = vector.load %arg9[%c0_11, %c0_12] : memref<128x1xf32, #tpu.memory_space<vmem>>, vector<128x1xf32>
    tpu.vector_store %arg9[%c0_11, %c0_12], %13 {strides = array<i32>} : memref<128x1xf32, #tpu.memory_space<vmem>>, vector<128x1xf32>,
    %c2_i32 = arith.constant 2 : i32
    %15 = arith.cmpi eq, %arg1, %c2_i32 : i32
    %16 = arith.extui %15 : i1 to i32
    %c0_i32_13 = arith.constant 0 : i32
    %17 = arith.cmpi ne, %16, %c0_i32_13 : i32
    scf.if %17 {
      %c0_14 = arith.constant 0 : index
      %c0_15 = arith.constant 0 : index
      %18 = vector.load %arg9[%c0_14, %c0_15] : memref<128x1xf32, #tpu.memory_space<vmem>>, vector<128x1xf32>
      %cst_16 = arith.constant 1.000000e+00 : f32
      %19 = vector.broadcast %cst_16 : f32 to vector<128x1xf32>
      %20 = arith.maximumf %18, %19 : vector<128x1xf32>
      %21 = tpu.reciprocal %20 : vector<128x1xf32> -> vector<128x1xf32>
      %cst_17 = arith.constant 0.000000e+00 : f32
      %22 = vector.broadcast %cst_17 : f32 to vector<128x1xf32>
      %23 = arith.cmpf ogt, %18, %22 : vector<128x1xf32>
      %c0_18 = arith.constant 0 : index
      %c0_19 = arith.constant 0 : index
      %24 = vector.load %arg8[%c0_18, %c0_19] : memref<128x64xf32, #tpu.memory_space<vmem>>, vector<128x64xf32>
      %25 = vector.broadcast %21 : vector<128x1xf32> to vector<128x64xf32>
      %26 = arith.mulf %24, %25 : vector<128x64xf32>
      %c0_20 = arith.constant 0 : index
      %c0_21 = arith.constant 0 : index
      %27 = vector.load %arg4[%c0_20, %c0_21] : memref<128x64xf32, #tpu.memory_space<vmem>>, vector<128x64xf32>
      %28 = vector.shape_cast %23 : vector<128x1xi1> to vector<128x1xi1>
      %29 = vector.broadcast %28 : vector<128x1xi1> to vector<128x64xi1>
      %30 = arith.select %29, %26, %27 : vector<128x64xi1>, vector<128x64xf32>
      %c0_22 = arith.constant 0 : index
      %c0_23 = arith.constant 0 : index
      %31 = vector.load %arg5[%c0_22, %c0_23] : memref<64x128xf32, #tpu.memory_space<vmem>>, vector<64x128xf32>
      %cst_24 = arith.constant dense<0.000000e+00> : vector<128x128xf32>
      %32 = tpu.matmul %30, %31, %cst_24 {dimension_numbers = #tpu.dot_dimension_numbers<[1], [0], [0], [1], [0, 0, 1, 1], [], []>} : vector<128x64xf32>, vector<64x128xf32>, vector<128x128xf32> -> vector<128x128xf32>
      %c0_25 = arith.constant 0 : index
      %c0_26 = arith.constant 0 : index
      %33 = vector.load %arg6[%c0_25, %c0_26] : memref<1x128xf32, #tpu.memory_space<vmem>>, vector<1x128xf32>
      %34 = vector.broadcast %33 : vector<1x128xf32> to vector<128x128xf32>
      %35 = arith.addf %32, %34 : vector<128x128xf32>
      %cst_27 = arith.constant 0.000000e+00 : f32
      %36 = vector.broadcast %cst_27 : f32 to vector<128x128xf32>
      %37 = arith.maximumf %35, %36 : vector<128x128xf32>
      %c0_28 = arith.constant 0 : index
      %c0_29 = arith.constant 0 : index
      %38 = vector.load %arg7[%c0_28, %c0_29] : memref<128x128xf32, #tpu.memory_space<vmem>>, vector<128x128xf32>
      tpu.vector_store %arg7[%c0_28, %c0_29], %37 {strides = array<i32>} : memref<128x128xf32, #tpu.memory_space<vmem>>, vector<128x128xf32>,
    } else {
    }
    return
  }
  func.func @transform_0(%arg0: i32, %arg1: i32) -> (i32, i32) {
    %c0_i32 = arith.constant 0 : i32
    return %arg0, %arg1 : i32, i32
  }
  func.func @transform_1(%arg0: i32, %arg1: i32) -> (i32, i32) {
    %c0_i32 = arith.constant 0 : i32
    %c0_i32_0 = arith.constant 0 : i32
    return %arg1, %c0_i32 : i32, i32
  }
  func.func @transform_2(%arg0: i32, %arg1: i32) -> (i32, i32) {
    %c0_i32 = arith.constant 0 : i32
    %c0_i32_0 = arith.constant 0 : i32
    return %arg0, %c0_i32 : i32, i32
  }
  func.func @transform_3(%arg0: i32, %arg1: i32) -> (i32, i32) {
    %c0_i32 = arith.constant 0 : i32
    %c0_i32_0 = arith.constant 0 : i32
    %c0_i32_1 = arith.constant 0 : i32
    return %c0_i32, %c0_i32_0 : i32, i32
  }
  func.func @transform_4(%arg0: i32, %arg1: i32) -> (i32, i32) {
    %c0_i32 = arith.constant 0 : i32
    %c0_i32_0 = arith.constant 0 : i32
    %c0_i32_1 = arith.constant 0 : i32
    return %c0_i32, %c0_i32_0 : i32, i32
  }
  func.func @transform_5(%arg0: i32, %arg1: i32) -> (i32, i32) {
    %c0_i32 = arith.constant 0 : i32
    %c0_i32_0 = arith.constant 0 : i32
    return %arg0, %c0_i32 : i32, i32
  }
}

</mosaic_0001>

<llo_original>
// kernel: tpu_custom_call.1
$region0: #{tpu_custom_call.1}
  #allocation0 [shape = 'u32[]', space=smem, size = 0x4, offset = 0x4, fixed_abs, tag = 'smem constant byte address 0x4 - core index']
  #allocation1 [shape = 'u32[144,128]{1,0:T(1,128)}', space=vmem, size = 0x12000, scoped, tag = 'internal scratch']
  #allocation2 [shape = 'f32[128,64]{1,0:T(8,128)}', space=vmem, size = 0x10000, scoped, tag = 'scratch operand']
  #allocation3 [shape = 'f32[128,1]{1,0:T(8,128)}', space=vmem, size = 0x10000, scoped, tag = 'scratch operand']
  %s0 = inlined_call_operand.vmem [shape: bf16[384,384], index: 0, kind: input, shape index: {}]
  %s1 = inlined_call_operand.vmem [shape: f32[384,64], index: 1, kind: input, shape index: {}]
  %s2 = inlined_call_operand.vmem [shape: f32[384,64], index: 2, kind: input, shape index: {}]
  %s3 = inlined_call_operand.vmem [shape: f32[64,128], index: 3, kind: input, shape index: {}]
  %s4 = inlined_call_operand.vmem [shape: f32[1,128], index: 4, kind: input, shape index: {}]
  %s5 = inlined_call_operand.hbm [shape: f32[384,128], index: 5, kind: output, shape index: {}]
  %s6 = sld [smem:[#allocation0]]
  $region102: #{tpu_custom_call.1} parent=0
    _
  %s8 = ssub.s32 1, %s6
  %s9 = scalar_select 0, %s8, %s6
  $region1: #{tpu_custom_call.1} parent=0
    #allocation4 [shape = 'u8[65536]{0}', space=vmem, size = 0x10000, scoped, tag = 'input window, operand 0']
    #allocation5 [shape = 'u8[131072]{0}', space=vmem, size = 0x20000, scoped, tag = 'output window, operand 0']
    #allocation6 [shape = 's32[2]{0}', space=sflag, size = 0x8, scoped, tag = 'scoped memory for tpu_custom_call.1']
    %10 = vsyncpa [#allocation6], 0
    %s11 = scalar_lea.sflag [#allocation6], 1
    %12 = vsyncpa %s11, 0
    loop: start=0, step=1, limit=11
    $region2: #{tpu_custom_call.1} parent=1 // loop_pre_header
      _
    $region3: #{tpu_custom_call.1} parent=1 // loop_header
      %s14 = sphi 0, %s18
      %p15 = scmp.ge.s32.totalorder %s14, 11
      %s21 = sphi 0, %s33
      %s22 = sphi 0, %s29
      %s23 = sphi 0, %s21
      %s24 = sphi 0, %s22
      %s25 = sphi 0, %s23
      %s26 = sphi 0, %s24
      %s38 = sphi 0, %s40
      %s41 = sphi 0, %s38
      %s42 = sphi 0, %s41
      %s58 = sphi 0, %s42
      %s64 = sphi 0, %s66
      %s67 = sphi 0, %s64
      %s68 = sphi 0, %s67
      %s84 = sphi 0, %s68
      %s90 = sphi 0, %s92
      %s93 = sphi 0, %s90
      %s94 = sphi 0, %s93
      %s110 = sphi 0, %s94
      %s114 = sphi 0, %s114
      %s116 = sphi 0, %s114
      %s117 = sphi 0, %s116
      %s131 = sphi 0, %s117
      %s135 = sphi 0, %s135
      %s137 = sphi 0, %s135
      %s138 = sphi 0, %s137
      %s152 = sphi 0, %s138
      %s158 = sphi 0, %s160
      %s161 = sphi 0, %s158
      %s162 = sphi 0, %s161
      %s178 = sphi 0, %s162
    $region4: #{tpu_custom_call.1} parent=1 // loop_header_branch
      %17 = sbr.rel (%p15) target = $region8
    $region5: #{tpu_custom_call.1} parent=1 // loop_body
      %s19 = ssub.s32 %s14, 1
      %s20 = ssub.s32 %s14, 2
      %s27 = sadd.s32 1, %s22
      %p28 = scmp.ge.s32.totalorder %s27, 3
      %s29 = scalar_select %p28, 0, %s27
      %s30 = sadd.s32 1, %s21
      %s31 = scalar_select %p28, %s30, %s21
      %p32 = scmp.ge.s32.totalorder %s31, 3
      %s33 = scalar_select %p32, 0, %s31
      %s34 = ssub.s32 %s21, %s33
      %s35 = ssub.s32 %s22, %s29
      %s36 = sor.u32 %s34, %s35
      %p37 = scmp.eq.s32.totalorder %s36, 0
      %s39 = sadd.s32 %s38, 1
      %s40 = scalar_select %p37, %s38, %s39
      %p43 = pneg %p37
      %p44 = scmp.eq.s32.totalorder %s14, 8
      %p45 = por %p43, %p44
      %p46 = scmp.ne.s32.totalorder %s38, %s41
      %p47 = scmp.eq.s32.totalorder %s14, 0
      %p48 = por %p46, %p47
      %p49 = scmp.ne.s32.totalorder %s38, %s41
      %p50 = scmp.eq.s32.totalorder %s19, 8
      %p51 = por %p49, %p50
      %p52 = scmp.ne.s32.totalorder %s41, %s42
      %p53 = scmp.eq.s32.totalorder %s19, 0
      %p54 = por %p52, %p53
      %p55 = scmp.ne.s32.totalorder %s41, %s42
      %p56 = scmp.eq.s32.totalorder %s20, 8
      %p57 = por %p55, %p56
      %p59 = scmp.ne.s32.totalorder %s42, %s58
      %p60 = scmp.eq.s32.totalorder %s20, 0
      %p61 = por %p59, %p60
      %s62 = ssub.s32 %s22, %s29
      %p63 = scmp.eq.s32.totalorder %s62, 0
      %s65 = sadd.s32 %s64, 1
      %s66 = scalar_select %p63, %s64, %s65
      %p69 = pneg %p63
      %p70 = scmp.eq.s32.totalorder %s14, 8
      %p71 = por %p69, %p70
      %p72 = scmp.ne.s32.totalorder %s64, %s67
      %p73 = scmp.eq.s32.totalorder %s14, 0
      %p74 = por %p72, %p73
      %p75 = scmp.ne.s32.totalorder %s64, %s67
      %p76 = scmp.eq.s32.totalorder %s19, 8
      %p77 = por %p75, %p76
      %p78 = scmp.ne.s32.totalorder %s67, %s68
      %p79 = scmp.eq.s32.totalorder %s19, 0
      %p80 = por %p78, %p79
      %p81 = scmp.ne.s32.totalorder %s67, %s68
      %p82 = scmp.eq.s32.totalorder %s20, 8
      %p83 = por %p81, %p82
      %p85 = scmp.ne.s32.totalorder %s68, %s84
      %p86 = scmp.eq.s32.totalorder %s20, 0
      %p87 = por %p85, %p86
      %s88 = ssub.s32 %s21, %s33
      %p89 = scmp.eq.s32.totalorder %s88, 0
      %s91 = sadd.s32 %s90, 1
      %s92 = scalar_select %p89, %s90, %s91
      %p95 = pneg %p89
      %p96 = scmp.eq.s32.totalorder %s14, 8
      %p97 = por %p95, %p96
      %p98 = scmp.ne.s32.totalorder %s90, %s93
      %p99 = scmp.eq.s32.totalorder %s14, 0
      %p100 = por %p98, %p99
      %p101 = scmp.ne.s32.totalorder %s90, %s93
      %p102 = scmp.eq.s32.totalorder %s19, 8
      %p103 = por %p101, %p102
      %p104 = scmp.ne.s32.totalorder %s93, %s94
      %p105 = scmp.eq.s32.totalorder %s19, 0
      %p106 = por %p104, %p105
      %p107 = scmp.ne.s32.totalorder %s93, %s94
      %p108 = scmp.eq.s32.totalorder %s20, 8
      %p109 = por %p107, %p108
      %p111 = scmp.ne.s32.totalorder %s94, %s110
      %p112 = scmp.eq.s32.totalorder %s20, 0
      %p113 = por %p111, %p112
      %s115 = sadd.s32 %s114, 1
      %p118 = scmp.eq.s32.totalorder %s14, 8
      %p119 = scmp.ne.s32.totalorder %s114, %s116
      %p120 = scmp.eq.s32.totalorder %s14, 0
      %p121 = por %p119, %p120
      %p122 = scmp.ne.s32.totalorder %s114, %s116
      %p123 = scmp.eq.s32.totalorder %s19, 8
      %p124 = por %p122, %p123
      %p125 = scmp.ne.s32.totalorder %s116, %s117
      %p126 = scmp.eq.s32.totalorder %s19, 0
      %p127 = por %p125, %p126
      %p128 = scmp.ne.s32.totalorder %s116, %s117
      %p129 = scmp.eq.s32.totalorder %s20, 8
      %p130 = por %p128, %p129
      %p132 = scmp.ne.s32.totalorder %s117, %s131
      %p133 = scmp.eq.s32.totalorder %s20, 0
      %p134 = por %p132, %p133
      %s136 = sadd.s32 %s135, 1
      %p139 = scmp.eq.s32.totalorder %s14, 8
      %p140 = scmp.ne.s32.totalorder %s135, %s137
      %p141 = scmp.eq.s32.totalorder %s14, 0
      %p142 = por %p140, %p141
      %p143 = scmp.ne.s32.totalorder %s135, %s137
      %p144 = scmp.eq.s32.totalorder %s19, 8
      %p145 = por %p143, %p144
      %p146 = scmp.ne.s32.totalorder %s137, %s138
      %p147 = scmp.eq.s32.totalorder %s19, 0
      %p148 = por %p146, %p147
      %p149 = scmp.ne.s32.totalorder %s137, %s138
      %p150 = scmp.eq.s32.totalorder %s20, 8
      %p151 = por %p149, %p150
      %p153 = scmp.ne.s32.totalorder %s138, %s152
      %p154 = scmp.eq.s32.totalorder %s20, 0
      %p155 = por %p153, %p154
      %s156 = ssub.s32 %s21, %s33
      %p157 = scmp.eq.s32.totalorder %s156, 0
      %s159 = sadd.s32 %s158, 1
      %s160 = scalar_select %p157, %s158, %s159
      %p163 = pneg %p157
      %p164 = scmp.eq.s32.totalorder %s14, 8
      %p165 = por %p163, %p164
      %p166 = scmp.ne.s32.totalorder %s158, %s161
      %p167 = scmp.eq.s32.totalorder %s14, 0
      %p168 = por %p166, %p167
      %p169 = scmp.ne.s32.totalorder %s158, %s161
      %p170 = scmp.eq.s32.totalorder %s19, 8
      %p171 = por %p169, %p170
      %p172 = scmp.ne.s32.totalorder %s161, %s162
      %p173 = scmp.eq.s32.totalorder %s19, 0
      %p174 = por %p172, %p173
      %p175 = scmp.ne.s32.totalorder %s161, %s162
      %p176 = scmp.eq.s32.totalorder %s20, 8
      %p177 = por %p175, %p176
      %p179 = scmp.ne.s32.totalorder %s162, %s178
      %p180 = scmp.eq.s32.totalorder %s20, 0
      %p181 = por %p179, %p180
      %p182 = scmp.le.s32.totalorder 1, %s14
      %p183 = scmp.lt.s32.totalorder %s14, 10
      %p184 = pnand %p182, %p183
      %p185 = pneg %p184
      // Predicated region
      $region9: #{tpu_custom_call.1} parent=5 // pred_check
        _
      $region10: #{tpu_custom_call.1} parent=5 // pred_check_branch
        %187 = sbr.rel (%p184) target = $region12
      $region11: #{tpu_custom_call.1} parent=5 // pred_region
        %s188 = ssub.s32 %s14, 1
        // Predicated region
        $region13: #{tpu_custom_call.1} parent=11 // pred_check
          %p189 = pneg %p127
        $region14: #{tpu_custom_call.1} parent=11 // pred_check_branch
          %191 = sbr.rel (%p189) target = $region16
        $region15: #{tpu_custom_call.1} parent=11 // pred_region
          _
        $region16: #{tpu_custom_call.1} parent=11 // pred_fallthru
          _
        // Predicated region
        $region17: #{tpu_custom_call.1} parent=11 // pred_check
          %p192 = pneg %p148
        $region18: #{tpu_custom_call.1} parent=11 // pred_check_branch
          %194 = sbr.rel (%p192) target = $region20
        $region19: #{tpu_custom_call.1} parent=11 // pred_region
          _
        $region20: #{tpu_custom_call.1} parent=11 // pred_fallthru
          _
      $region12: #{tpu_custom_call.1} parent=5 // pred_fallthru
        _
      %p195 = scmp.lt.s32.totalorder %s14, 9
      // Predicated region
      $region21: #{tpu_custom_call.1} parent=5 // pred_check
        %p196 = pneg %p195
      $region22: #{tpu_custom_call.1} parent=5 // pred_check_branch
        %198 = sbr.rel (%p196) target = $region24
      $region23: #{tpu_custom_call.1} parent=5 // pred_region
        // Predicated region
        $region25: #{tpu_custom_call.1} parent=23 // pred_check
          %p199 = pneg %p48
        $region26: #{tpu_custom_call.1} parent=23 // pred_check_branch
          %201 = sbr.rel (%p199) target = $region28
        $region27: #{tpu_custom_call.1} parent=23 // pred_region
          %s202 = sand.u32 %s38, 1
          %s203 = sand.u32 %s38, 1
          %s204 = smul.addr %s203, 64
          %s205 = scalar_lea.vmem [#allocation4], %s204
          %s206 = smul.u32 16, %s21
          %s207 = smul.addr %s206, 3
          %s208 = sadd.s32 %s22, %s207
          %s209 = smul.addr %s208, 4
          %s210 = scalar_lea.vmem %s0, %s209
          // Predicated region
          $region29: #{tpu_custom_call.1} parent=27 // pred_check
            _
          $region30: #{tpu_custom_call.1} parent=27 // pred_check_branch
            %212 = sbr.rel (0) target = $region32
          $region31: #{tpu_custom_call.1} parent=27 // pred_region
            // Predicated region
            $region33: #{tpu_custom_call.1} parent=31 // pred_check
              _
            $region34: #{tpu_custom_call.1} parent=31 // pred_check_branch
              %214 = sbr.rel target = $region36
            $region35: #{tpu_custom_call.1} parent=31 // pred_region
              // Predicated region
              $region48: #{tpu_custom_call.1} parent=35 // pred_check
                _
              $region49: #{tpu_custom_call.1} parent=35 // pred_check_branch
                %259 = sbr.rel (0) target = $region51
              $region50: #{tpu_custom_call.1} parent=35 // pred_region
                loop: start=0, step=1, limit=1
                $region52: #{tpu_custom_call.1} parent=50 // loop_pre_header
                  _
                $region53: #{tpu_custom_call.1} parent=50 // loop_header
                  %s261 = sphi 0, %s265
                  %p262 = scmp.ge.s32.totalorder %s261, 1
                  %s266 = sphi %s210, %s210
                  %s267 = sphi %s205, %s205
                $region54: #{tpu_custom_call.1} parent=50 // loop_header_branch
                  %264 = sbr.rel (%p262) target = $region58
                $region55: #{tpu_custom_call.1} parent=50 // loop_body
                  _
                $region56: #{tpu_custom_call.1} parent=50 // loop_footer
                  %s265 = sadd.s32 1, %s261
                $region57: #{tpu_custom_call.1} parent=50 // loop_footer_branch
                  %260 = sbr.rel target = $region53
                $region58: #{tpu_custom_call.1} parent=50 // loop_exit
                  _
                loop: start=0, step=1, limit=1
                $region59: #{tpu_custom_call.1} parent=50 // loop_pre_header
                  _
                $region60: #{tpu_custom_call.1} parent=50 // loop_header
                  %s270 = sphi 0, %s274
                  %p271 = scmp.ge.s32.totalorder %s270, 1
                  %s275 = sphi %s210, %s210
                  %s276 = sphi %s205, %s205
                $region61: #{tpu_custom_call.1} parent=50 // loop_header_branch
                  %273 = sbr.rel (%p271) target = $region65
                $region62: #{tpu_custom_call.1} parent=50 // loop_body
                  %v277 = vld [vmem:[%s275] sm:$0xf]
                  %278 = vst [vmem:[%s276] sm:$0xf] %v277
                  %v279 = vld [vmem:[%s275 + $0xc] sm:$0xf]
                  %280 = vst [vmem:[%s276 + $0x4] sm:$0xf] %v279
                  %v281 = vld [vmem:[%s275 + $0x18] sm:$0xf]
                  %282 = vst [vmem:[%s276 + $0x8] sm:$0xf] %v281
                  %v283 = vld [vmem:[%s275 + $0x24] sm:$0xf]
                  %284 = vst [vmem:[%s276 + $0xc] sm:$0xf] %v283
                  %v285 = vld [vmem:[%s275 + $0x30] sm:$0xf]
                  %286 = vst [vmem:[%s276 + $0x10] sm:$0xf] %v285
                  %v287 = vld [vmem:[%s275 + $0x3c] sm:$0xf]
                  %288 = vst [vmem:[%s276 + $0x14] sm:$0xf] %v287
                  %v289 = vld [vmem:[%s275 + $0x48] sm:$0xf]
                  %290 = vst [vmem:[%s276 + $0x18] sm:$0xf] %v289
                  %v291 = vld [vmem:[%s275 + $0x54] sm:$0xf]
                  %292 = vst [vmem:[%s276 + $0x1c] sm:$0xf] %v291
                  %v293 = vld [vmem:[%s275 + $0x60] sm:$0xf]
                  %294 = vst [vmem:[%s276 + $0x20] sm:$0xf] %v293
                  %v295 = vld [vmem:[%s275 + $0x6c] sm:$0xf]
                  %296 = vst [vmem:[%s276 + $0x24] sm:$0xf] %v295
                  %v297 = vld [vmem:[%s275 + $0x78] sm:$0xf]
                  %298 = vst [vmem:[%s276 + $0x28] sm:$0xf] %v297
                  %v299 = vld [vmem:[%s275 + $0x84] sm:$0xf]
                  %300 = vst [vmem:[%s276 + $0x2c] sm:$0xf] %v299
                  %v301 = vld [vmem:[%s275 + $0x90] sm:$0xf]
                  %302 = vst [vmem:[%s276 + $0x30] sm:$0xf] %v301
                  %v303 = vld [vmem:[%s275 + $0x9c] sm:$0xf]
                  %304 = vst [vmem:[%s276 + $0x34] sm:$0xf] %v303
                  %v305 = vld [vmem:[%s275 + $0xa8] sm:$0xf]
                  %306 = vst [vmem:[%s276 + $0x38] sm:$0xf] %v305
                  %v307 = vld [vmem:[%s275 + $0xb4] sm:$0xf]
                  %308 = vst [vmem:[%s276 + $0x3c] sm:$0xf] %v307
                $region63: #{tpu_custom_call.1} parent=50 // loop_footer
                  %s274 = sadd.s32 1, %s270
                $region64: #{tpu_custom_call.1} parent=50 // loop_footer_branch
                  %269 = sbr.rel target = $region60
                $region65: #{tpu_custom_call.1} parent=50 // loop_exit
                  _
              $region51: #{tpu_custom_call.1} parent=35 // pred_fallthru
                _
            $region36: #{tpu_custom_call.1} parent=31 // pred_fallthru
              _
            // Predicated region
            $region37: #{tpu_custom_call.1} parent=31 // pred_check
              _
            $region38: #{tpu_custom_call.1} parent=31 // pred_check_branch
              %216 = sbr.rel (0) target = $region40
            $region39: #{tpu_custom_call.1} parent=31 // pred_region
              loop: start=0, step=1, limit=1
              $region41: #{tpu_custom_call.1} parent=39 // loop_pre_header
                _
              $region42: #{tpu_custom_call.1} parent=39 // loop_header
                %s219 = sphi 0, %s223
                %p220 = scmp.ge.s32.totalorder %s219, 1
                %s224 = sphi %s210, %s210
                %s225 = sphi %s205, %s205
              $region43: #{tpu_custom_call.1} parent=39 // loop_header_branch
                %222 = sbr.rel (%p220) target = $region47
              $region44: #{tpu_custom_call.1} parent=39 // loop_body
                %v226 = vld [vmem:[%s224] sm:$0xf]
                %227 = vst [vmem:[%s225] sm:$0xf] %v226
                %v228 = vld [vmem:[%s224 + $0xc] sm:$0xf]
                %229 = vst [vmem:[%s225 + $0x4] sm:$0xf] %v228
                %v230 = vld [vmem:[%s224 + $0x18] sm:$0xf]
                %231 = vst [vmem:[%s225 + $0x8] sm:$0xf] %v230
                %v232 = vld [vmem:[%s224 + $0x24] sm:$0xf]
                %233 = vst [vmem:[%s225 + $0xc] sm:$0xf] %v232
                %v234 = vld [vmem:[%s224 + $0x30] sm:$0xf]
                %235 = vst [vmem:[%s225 + $0x10] sm:$0xf] %v234
                %v236 = vld [vmem:[%s224 + $0x3c] sm:$0xf]
                %237 = vst [vmem:[%s225 + $0x14] sm:$0xf] %v236
                %v238 = vld [vmem:[%s224 + $0x48] sm:$0xf]
                %239 = vst [vmem:[%s225 + $0x18] sm:$0xf] %v238
                %v240 = vld [vmem:[%s224 + $0x54] sm:$0xf]
                %241 = vst [vmem:[%s225 + $0x1c] sm:$0xf] %v240
                %v242 = vld [vmem:[%s224 + $0x60] sm:$0xf]
                %243 = vst [vmem:[%s225 + $0x20] sm:$0xf] %v242
                %v244 = vld [vmem:[%s224 + $0x6c] sm:$0xf]
                %245 = vst [vmem:[%s225 + $0x24] sm:$0xf] %v244
                %v246 = vld [vmem:[%s224 + $0x78] sm:$0xf]
                %247 = vst [vmem:[%s225 + $0x28] sm:$0xf] %v246
                %v248 = vld [vmem:[%s224 + $0x84] sm:$0xf]
                %249 = vst [vmem:[%s225 + $0x2c] sm:$0xf] %v248
                %v250 = vld [vmem:[%s224 + $0x90] sm:$0xf]
                %251 = vst [vmem:[%s225 + $0x30] sm:$0xf] %v250
                %v252 = vld [vmem:[%s224 + $0x9c] sm:$0xf]
                %253 = vst [vmem:[%s225 + $0x34] sm:$0xf] %v252
                %v254 = vld [vmem:[%s224 + $0xa8] sm:$0xf]
                %255 = vst [vmem:[%s225 + $0x38] sm:$0xf] %v254
                %v256 = vld [vmem:[%s224 + $0xb4] sm:$0xf]
                %257 = vst [vmem:[%s225 + $0x3c] sm:$0xf] %v256
              $region45: #{tpu_custom_call.1} parent=39 // loop_footer
                %s223 = sadd.s32 1, %s219
              $region46: #{tpu_custom_call.1} parent=39 // loop_footer_branch
                %218 = sbr.rel target = $region42
              $region47: #{tpu_custom_call.1} parent=39 // loop_exit
                _
            $region40: #{tpu_custom_call.1} parent=31 // pred_fallthru
              _
          $region32: #{tpu_custom_call.1} parent=27 // pred_fallthru
            _
          %309 = vnop
        $region28: #{tpu_custom_call.1} parent=23 // pred_fallthru
          _
        // Predicated region
        $region66: #{tpu_custom_call.1} parent=23 // pred_check
          %p310 = pneg %p74
        $region67: #{tpu_custom_call.1} parent=23 // pred_check_branch
          %312 = sbr.rel (%p310) target = $region69
        $region68: #{tpu_custom_call.1} parent=23 // pred_region
          %s313 = smul.u32 16, %s22
          %p314 = scmp.lt.s32.totalorder %s313, 47
          %s315 = scalar_select %p314, %s313, 47
          %s316 = smul.addr %s315, 8
          %s317 = scalar_lea.vmem %s1, %s316
          %s318 = smul.u32 16, %s22
        $region69: #{tpu_custom_call.1} parent=23 // pred_fallthru
          _
        // Predicated region
        $region70: #{tpu_custom_call.1} parent=23 // pred_check
          %p319 = pneg %p100
        $region71: #{tpu_custom_call.1} parent=23 // pred_check_branch
          %321 = sbr.rel (%p319) target = $region73
        $region72: #{tpu_custom_call.1} parent=23 // pred_region
          %s322 = smul.u32 16, %s21
          %p323 = scmp.lt.s32.totalorder %s322, 47
          %s324 = scalar_select %p323, %s322, 47
          %s325 = smul.addr %s324, 8
          %s326 = scalar_lea.vmem %s2, %s325
          %s327 = smul.u32 16, %s21
        $region73: #{tpu_custom_call.1} parent=23 // pred_fallthru
          _
      $region24: #{tpu_custom_call.1} parent=5 // pred_fallthru
        _
      %p328 = scmp.le.s32.totalorder 1, %s14
      %p329 = scmp.lt.s32.totalorder %s14, 10
      %p330 = pnand %p328, %p329
      %p331 = pneg %p330
      // Predicated region
      $region74: #{tpu_custom_call.1} parent=5 // pred_check
        _
      $region75: #{tpu_custom_call.1} parent=5 // pred_check_branch
        %333 = sbr.rel (%p330) target = $region77
      $region76: #{tpu_custom_call.1} parent=5 // pred_region
        %s334 = ssub.s32 %s14, 1
        %s335 = sand.u32 %s41, 1
        %s336 = sand.u32 %s41, 1
        %s337 = smul.addr %s336, 64
        %s338 = scalar_lea.vmem [#allocation4], %s337
        // Predicated region
        $region78: #{tpu_custom_call.1} parent=76 // pred_check
          %p339 = pneg %p54
        $region79: #{tpu_custom_call.1} parent=76 // pred_check_branch
          %341 = sbr.rel (%p339) target = $region81
        $region80: #{tpu_custom_call.1} parent=76 // pred_region
          _
        $region81: #{tpu_custom_call.1} parent=76 // pred_fallthru
          _
        %s342 = sand.u32 %s41, 1
        %s343 = sand.u32 %s41, 1
        %s344 = smul.addr %s343, 64
        %s345 = scalar_lea.vmem [#allocation4], %s344
        %p346 = pneg %p54
        %p347 = pneg %p51
        %s348 = smul.u32 16, %s24
        %p349 = scmp.lt.s32.totalorder %s348, 47
        %s350 = scalar_select %p349, %s348, 47
        %s351 = smul.addr %s350, 8
        %s352 = scalar_lea.vmem %s1, %s351
        %p353 = pneg %p80
        %p354 = pneg %p77
        %s355 = smul.u32 16, %s23
        %p356 = scmp.lt.s32.totalorder %s355, 47
        %s357 = scalar_select %p356, %s355, 47
        %s358 = smul.addr %s357, 8
        %s359 = scalar_lea.vmem %s2, %s358
        %p360 = pneg %p106
        %p361 = pneg %p103
        %p362 = pneg %p127
        %p363 = pneg %p124
        %p364 = pneg %p148
        %p365 = pneg %p145
        %p366 = pneg %p174
        %p367 = pneg %p171
        %s368 = sand.u32 %s161, 1
        %s369 = scalar_lea.sflag [#allocation6], %s368
        %s370 = sand.u32 %s161, 1
        %s371 = smul.addr %s370, 128
        %s372 = scalar_lea.vmem [#allocation5], %s371
        %s373 = smul.u32 16, %s23
        %s374 = smul.u32 16, %s24
        %p375 = scmp.lt.s32.totalorder %s374, 47
        %s376 = scalar_select %p375, %s374, 47
        %s377 = smul.addr %s376, 8
        %s378 = scalar_lea.vmem %s1, %s377
        %s379 = smul.u32 16, %s24
        %s380 = smul.u32 16, %s23
        %p381 = scmp.lt.s32.totalorder %s380, 47
        %s382 = scalar_select %p381, %s380, 47
        %s383 = smul.addr %s382, 8
        %s384 = scalar_lea.vmem %s2, %s383
        %s385 = smul.u32 16, %s23
        %s386 = smul.u32 16, %s23
        %p387 = scmp.eq.s32.totalorder %s24, 0
        // Predicated region
        $region82: #{tpu_custom_call.1} parent=76 // pred_check
          %p388 = pneg %p387
        $region83: #{tpu_custom_call.1} parent=76 // pred_check_branch
          %390 = sbr.rel (%p388) target = $region85
        $region84: #{tpu_custom_call.1} parent=76 // pred_region
          %vm391 = vcmask 523264
          %392 = vst.msk [vmem:[#allocation2] sm:$0xff] %vm391, 0.0
          %393 = vst.msk [vmem:[#allocation2 + $0x8] sm:$0xff] %vm391, 0.0
          %394 = vst.msk [vmem:[#allocation2 + $0x10] sm:$0xff] %vm391, 0.0
          %395 = vst.msk [vmem:[#allocation2 + $0x18] sm:$0xff] %vm391, 0.0
          %396 = vst.msk [vmem:[#allocation2 + $0x20] sm:$0xff] %vm391, 0.0
          %397 = vst.msk [vmem:[#allocation2 + $0x28] sm:$0xff] %vm391, 0.0
          %398 = vst.msk [vmem:[#allocation2 + $0x30] sm:$0xff] %vm391, 0.0
          %399 = vst.msk [vmem:[#allocation2 + $0x38] sm:$0xff] %vm391, 0.0
          %400 = vst.msk [vmem:[#allocation2 + $0x40] sm:$0xff] %vm391, 0.0
          %401 = vst.msk [vmem:[#allocation2 + $0x48] sm:$0xff] %vm391, 0.0
          %402 = vst.msk [vmem:[#allocation2 + $0x50] sm:$0xff] %vm391, 0.0
          %403 = vst.msk [vmem:[#allocation2 + $0x58] sm:$0xff] %vm391, 0.0
          %404 = vst.msk [vmem:[#allocation2 + $0x60] sm:$0xff] %vm391, 0.0
          %405 = vst.msk [vmem:[#allocation2 + $0x68] sm:$0xff] %vm391, 0.0
          %406 = vst.msk [vmem:[#allocation2 + $0x70] sm:$0xff] %vm391, 0.0
          %407 = vst.msk [vmem:[#allocation2 + $0x78] sm:$0xff] %vm391, 0.0
          %vm408 = vcmask 7168
          %409 = vst.msk [vmem:[#allocation3] sm:$0xff] %vm408, 0.0
          %410 = vst.msk [vmem:[#allocation3 + $0x8] sm:$0xff] %vm408, 0.0
          %411 = vst.msk [vmem:[#allocation3 + $0x10] sm:$0xff] %vm408, 0.0
          %412 = vst.msk [vmem:[#allocation3 + $0x18] sm:$0xff] %vm408, 0.0
          %413 = vst.msk [vmem:[#allocation3 + $0x20] sm:$0xff] %vm408, 0.0
          %414 = vst.msk [vmem:[#allocation3 + $0x28] sm:$0xff] %vm408, 0.0
          %415 = vst.msk [vmem:[#allocation3 + $0x30] sm:$0xff] %vm408, 0.0
          %416 = vst.msk [vmem:[#allocation3 + $0x38] sm:$0xff] %vm408, 0.0
          %417 = vst.msk [vmem:[#allocation3 + $0x40] sm:$0xff] %vm408, 0.0
          %418 = vst.msk [vmem:[#allocation3 + $0x48] sm:$0xff] %vm408, 0.0
          %419 = vst.msk [vmem:[#allocation3 + $0x50] sm:$0xff] %vm408, 0.0
          %420 = vst.msk [vmem:[#allocation3 + $0x58] sm:$0xff] %vm408, 0.0
          %421 = vst.msk [vmem:[#allocation3 + $0x60] sm:$0xff] %vm408, 0.0
          %422 = vst.msk [vmem:[#allocation3 + $0x68] sm:$0xff] %vm408, 0.0
          %423 = vst.msk [vmem:[#allocation3 + $0x70] sm:$0xff] %vm408, 0.0
          %424 = vst.msk [vmem:[#allocation3 + $0x78] sm:$0xff] %vm408, 0.0
        $region85: #{tpu_custom_call.1} parent=76 // pred_fallthru
          _
        %v425 = vld [vmem:[%s338] sm:$0xf]
        %v426 = vld [vmem:[%s338 + $0x4] sm:$0xf]
        %v427 = vld [vmem:[%s338 + $0x8] sm:$0xf]
        %v428 = vld [vmem:[%s338 + $0xc] sm:$0xf]
        %v429 = vld [vmem:[%s338 + $0x10] sm:$0xf]
        %v430 = vld [vmem:[%s338 + $0x14] sm:$0xf]
        %v431 = vld [vmem:[%s338 + $0x18] sm:$0xf]
        %v432 = vld [vmem:[%s338 + $0x1c] sm:$0xf]
        %v433 = vld [vmem:[%s338 + $0x20] sm:$0xf]
        %v434 = vld [vmem:[%s338 + $0x24] sm:$0xf]
        %v435 = vld [vmem:[%s338 + $0x28] sm:$0xf]
        %v436 = vld [vmem:[%s338 + $0x2c] sm:$0xf]
        %v437 = vld [vmem:[%s338 + $0x30] sm:$0xf]
        %v438 = vld [vmem:[%s338 + $0x34] sm:$0xf]
        %v439 = vld [vmem:[%s338 + $0x38] sm:$0xf]
        %v440 = vld [vmem:[%s338 + $0x3c] sm:$0xf]
        %v441 = vunpack.c.l.bf16 %v425
        %v442 = vunpack.c.l.bf16 %v426
        %v443 = vunpack.c.l.bf16 %v427
        %v444 = vunpack.c.l.bf16 %v428
        %v445 = vunpack.c.l.bf16 %v429
        %v446 = vunpack.c.l.bf16 %v430
        %v447 = vunpack.c.l.bf16 %v431
        %v448 = vunpack.c.l.bf16 %v432
        %v449 = vunpack.c.l.bf16 %v433
        %v450 = vunpack.c.l.bf16 %v434
        %v451 = vunpack.c.l.bf16 %v435
        %v452 = vunpack.c.l.bf16 %v436
        %v453 = vunpack.c.l.bf16 %v437
        %v454 = vunpack.c.l.bf16 %v438
        %v455 = vunpack.c.l.bf16 %v439
        %v456 = vunpack.c.l.bf16 %v440
        %v457 = vld [vmem:[#allocation2] sm:$0xff]
        %v458 = vld [vmem:[#allocation2 + $0x8] sm:$0xff]
        %v459 = vld [vmem:[#allocation2 + $0x10] sm:$0xff]
        %v460 = vld [vmem:[#allocation2 + $0x18] sm:$0xff]
        %v461 = vld [vmem:[#allocation2 + $0x20] sm:$0xff]
        %v462 = vld [vmem:[#allocation2 + $0x28] sm:$0xff]
        %v463 = vld [vmem:[#allocation2 + $0x30] sm:$0xff]
        %v464 = vld [vmem:[#allocation2 + $0x38] sm:$0xff]
        %v465 = vld [vmem:[#allocation2 + $0x40] sm:$0xff]
        %v466 = vld [vmem:[#allocation2 + $0x48] sm:$0xff]
        %v467 = vld [vmem:[#allocation2 + $0x50] sm:$0xff]
        %v468 = vld [vmem:[#allocation2 + $0x58] sm:$0xff]
        %v469 = vld [vmem:[#allocation2 + $0x60] sm:$0xff]
        %v470 = vld [vmem:[#allocation2 + $0x68] sm:$0xff]
        %v471 = vld [vmem:[#allocation2 + $0x70] sm:$0xff]
        %v472 = vld [vmem:[#allocation2 + $0x78] sm:$0xff]
        %v473 = vld [vmem:[%s378] sm:$0xff]
        %v474 = vld [vmem:[%s378 + $0x8] sm:$0xff]
        %v475 = vld [vmem:[%s378 + $0x10] sm:$0xff]
        %v476 = vld [vmem:[%s378 + $0x18] sm:$0xff]
        %v477 = vld [vmem:[%s378 + $0x20] sm:$0xff]
        %v478 = vld [vmem:[%s378 + $0x28] sm:$0xff]
        %v479 = vld [vmem:[%s378 + $0x30] sm:$0xff]
        %v480 = vld [vmem:[%s378 + $0x38] sm:$0xff]
        %v481 = vld [vmem:[%s378 + $0x40] sm:$0xff]
        %v482 = vld [vmem:[%s378 + $0x48] sm:$0xff]
        %v483 = vld [vmem:[%s378 + $0x50] sm:$0xff]
        %v484 = vld [vmem:[%s378 + $0x58] sm:$0xff]
        %v485 = vld [vmem:[%s378 + $0x60] sm:$0xff]
        %v486 = vld [vmem:[%s378 + $0x68] sm:$0xff]
        %v487 = vld [vmem:[%s378 + $0x70] sm:$0xff]
        %v488 = vld [vmem:[%s378 + $0x78] sm:$0xff]
        %489 = vmatprep.subr.mxu0 0.0
        %490 = vmatpush1.msra.mxu0 %v473
        %491 = vmatprep.subr.mxu0 0.0
        %492 = vmatpush1.msra.mxu0 %v474
        %493 = vmatprep.subr.mxu0 0.0
        %494 = vmatpush1.msra.mxu0 %v475
        %495 = vmatprep.subr.mxu0 0.0
        %496 = vmatpush1.msra.mxu0 %v476
        %497 = vmatprep.subr.mxu0 0.0
        %498 = vmatpush1.msra.mxu0 %v477
        %499 = vmatprep.subr.mxu0 0.0
        %500 = vmatpush1.msra.mxu0 %v478
        %501 = vmatprep.subr.mxu0 0.0
        %502 = vmatpush1.msra.mxu0 %v479
        %503 = vmatprep.subr.mxu0 0.0
        %504 = vmatpush1.msra.mxu0 %v480
        %505 = vmatprep.subr.mxu0 0.0
        %506 = vmatpush1.msra.mxu0 %v481
        %507 = vmatprep.subr.mxu0 0.0
        %508 = vmatpush1.msra.mxu0 %v482
        %509 = vmatprep.subr.mxu0 0.0
        %510 = vmatpush1.msra.mxu0 %v483
        %511 = vmatprep.subr.mxu0 0.0
        %512 = vmatpush1.msra.mxu0 %v484
        %513 = vmatprep.subr.mxu0 0.0
        %514 = vmatpush1.msra.mxu0 %v485
        %515 = vmatprep.subr.mxu0 0.0
        %516 = vmatpush1.msra.mxu0 %v486
        %517 = vmatprep.subr.mxu0 0.0
        %518 = vmatpush1.msra.mxu0 %v487
        %519 = vmatprep.subr.mxu0 0.0
        %520 = vmatpush1.msra.mxu0 %v488
        %521 = vmatprep.subr.mxu0 0.0
        %522 = vmatpush1.msra.mxu0 0.0
        %523 = vmatprep.subr.mxu0 0.0
        %524 = vmatpush1.msra.mxu0 0.0
        %525 = vmatprep.subr.mxu0 0.0
        %526 = vmatpush1.msra.mxu0 0.0
        %527 = vmatprep.subr.mxu0 0.0
        %528 = vmatpush1.msra.mxu0 0.0
        %529 = vmatprep.subr.mxu0 0.0
        %530 = vmatpush1.msra.mxu0 0.0
        %531 = vmatprep.subr.mxu0 0.0
        %532 = vmatpush1.msra.mxu0 0.0
        %533 = vmatprep.subr.mxu0 0.0
        %534 = vmatpush1.msra.mxu0 0.0
        %535 = vmatprep.subr.mxu0 0.0
        %536 = vmatpush1.msra.mxu0 0.0
        %537 = vmatprep.subr.mxu0 0.0
        %538 = vmatpush1.msra.mxu0 0.0
        %539 = vmatprep.subr.mxu0 0.0
        %540 = vmatpush1.msra.mxu0 0.0
        %541 = vmatprep.subr.mxu0 0.0
        %542 = vmatpush1.msra.mxu0 0.0
        %543 = vmatprep.subr.mxu0 0.0
        %544 = vmatpush1.msra.mxu0 0.0
        %545 = vmatprep.subr.mxu0 0.0
        %546 = vmatpush1.msra.mxu0 0.0
        %547 = vmatprep.subr.mxu0 0.0
        %548 = vmatpush1.msra.mxu0 0.0
        %549 = vmatprep.subr.mxu0 0.0
        %550 = vmatpush1.msra.mxu0 0.0
        %551 = vmatprep.subr.mxu0 0.0
        %552 = vmatpush1.msra.mxu0 0.0
        %553 = vmatprep.mubr.f32.mxu0 0.0
        %554 = vmatmul.mubr.f32.gmra.mrb[0].mxu0 %v441
        %v555 = vpop.f32.mrb[0].mxu0
        %v556 = vadd.f32 0.0, %v555
        %v557 = vpop.f32.mrb[0].mxu0
        %558 = vmatprep.mubr.f32.mxu0 0.0
        %559 = vmatmul.mubr.f32.gmra.mrb[0].mxu0 %v442
        %v560 = vpop.f32.mrb[0].mxu0
        %v561 = vadd.f32 0.0, %v560
        %v562 = vpop.f32.mrb[0].mxu0
        %563 = vmatprep.mubr.f32.mxu0 0.0
        %564 = vmatmul.mubr.f32.gmra.mrb[0].mxu0 %v443
        %v565 = vpop.f32.mrb[0].mxu0
        %v566 = vadd.f32 0.0, %v565
        %v567 = vpop.f32.mrb[0].mxu0
        %568 = vmatprep.mubr.f32.mxu0 0.0
        %569 = vmatmul.mubr.f32.gmra.mrb[0].mxu0 %v444
        %v570 = vpop.f32.mrb[0].mxu0
        %v571 = vadd.f32 0.0, %v570
        %v572 = vpop.f32.mrb[0].mxu0
        %573 = vmatprep.mubr.f32.mxu0 0.0
        %574 = vmatmul.mubr.f32.gmra.mrb[0].mxu0 %v445
        %v575 = vpop.f32.mrb[0].mxu0
        %v576 = vadd.f32 0.0, %v575
        %v577 = vpop.f32.mrb[0].mxu0
        %578 = vmatprep.mubr.f32.mxu0 0.0
        %579 = vmatmul.mubr.f32.gmra.mrb[0].mxu0 %v446
        %v580 = vpop.f32.mrb[0].mxu0
        %v581 = vadd.f32 0.0, %v580
        %v582 = vpop.f32.mrb[0].mxu0
        %583 = vmatprep.mubr.f32.mxu0 0.0
        %584 = vmatmul.mubr.f32.gmra.mrb[0].mxu0 %v447
        %v585 = vpop.f32.mrb[0].mxu0
        %v586 = vadd.f32 0.0, %v585
        %v587 = vpop.f32.mrb[0].mxu0
        %588 = vmatprep.mubr.f32.mxu0 0.0
        %589 = vmatmul.mubr.f32.gmra.mrb[0].mxu0 %v448
        %v590 = vpop.f32.mrb[0].mxu0
        %v591 = vadd.f32 0.0, %v590
        %v592 = vpop.f32.mrb[0].mxu0
        %593 = vmatprep.mubr.f32.mxu0 0.0
        %594 = vmatmul.mubr.f32.gmra.mrb[0].mxu0 %v449
        %v595 = vpop.f32.mrb[0].mxu0
        %v596 = vadd.f32 0.0, %v595
        %v597 = vpop.f32.mrb[0].mxu0
        %598 = vmatprep.mubr.f32.mxu0 0.0
        %599 = vmatmul.mubr.f32.gmra.mrb[0].mxu0 %v450
        %v600 = vpop.f32.mrb[0].mxu0
        %v601 = vadd.f32 0.0, %v600
        %v602 = vpop.f32.mrb[0].mxu0
        %603 = vmatprep.mubr.f32.mxu0 0.0
        %604 = vmatmul.mubr.f32.gmra.mrb[0].mxu0 %v451
        %v605 = vpop.f32.mrb[0].mxu0
        %v606 = vadd.f32 0.0, %v605
        %v607 = vpop.f32.mrb[0].mxu0
        %608 = vmatprep.mubr.f32.mxu0 0.0
        %609 = vmatmul.mubr.f32.gmra.mrb[0].mxu0 %v452
        %v610 = vpop.f32.mrb[0].mxu0
        %v611 = vadd.f32 0.0, %v610
        %v612 = vpop.f32.mrb[0].mxu0
        %613 = vmatprep.mubr.f32.mxu0 0.0
        %614 = vmatmul.mubr.f32.gmra.mrb[0].mxu0 %v453
        %v615 = vpop.f32.mrb[0].mxu0
        %v616 = vadd.f32 0.0, %v615
        %v617 = vpop.f32.mrb[0].mxu0
        %618 = vmatprep.mubr.f32.mxu0 0.0
        %619 = vmatmul.mubr.f32.gmra.mrb[0].mxu0 %v454
        %v620 = vpop.f32.mrb[0].mxu0
        %v621 = vadd.f32 0.0, %v620
        %v622 = vpop.f32.mrb[0].mxu0
        %623 = vmatprep.mubr.f32.mxu0 0.0
        %624 = vmatmul.mubr.f32.gmra.mrb[0].mxu0 %v455
        %v625 = vpop.f32.mrb[0].mxu0
        %v626 = vadd.f32 0.0, %v625
        %v627 = vpop.f32.mrb[0].mxu0
        %628 = vmatprep.mubr.f32.mxu0 0.0
        %629 = vmatmul.mubr.f32.gmra.mrb[0].mxu0 %v456
        %v630 = vpop.f32.mrb[0].mxu0
        %v631 = vadd.f32 0.0, %v630
        %v632 = vpop.f32.mrb[0].mxu0
        %633 = vdwg.mxu0
        %v634 = vadd.f32 %v457, %v556
        %v635 = vadd.f32 %v458, %v561
        %v636 = vadd.f32 %v459, %v566
        %v637 = vadd.f32 %v460, %v571
        %v638 = vadd.f32 %v461, %v576
        %v639 = vadd.f32 %v462, %v581
        %v640 = vadd.f32 %v463, %v586
        %v641 = vadd.f32 %v464, %v591
        %v642 = vadd.f32 %v465, %v596
        %v643 = vadd.f32 %v466, %v601
        %v644 = vadd.f32 %v467, %v606
        %v645 = vadd.f32 %v468, %v611
        %v646 = vadd.f32 %v469, %v616
        %v647 = vadd.f32 %v470, %v621
        %v648 = vadd.f32 %v471, %v626
        %v649 = vadd.f32 %v472, %v631
        %vm650 = vcmask 523264
        %651 = vst.msk [vmem:[#allocation2] sm:$0xff] %vm650, %v634
        %652 = vst.msk [vmem:[#allocation2 + $0x8] sm:$0xff] %vm650, %v635
        %653 = vst.msk [vmem:[#allocation2 + $0x10] sm:$0xff] %vm650, %v636
        %654 = vst.msk [vmem:[#allocation2 + $0x18] sm:$0xff] %vm650, %v637
        %655 = vst.msk [vmem:[#allocation2 + $0x20] sm:$0xff] %vm650, %v638
        %656 = vst.msk [vmem:[#allocation2 + $0x28] sm:$0xff] %vm650, %v639
        %657 = vst.msk [vmem:[#allocation2 + $0x30] sm:$0xff] %vm650, %v640
        %658 = vst.msk [vmem:[#allocation2 + $0x38] sm:$0xff] %vm650, %v641
        %659 = vst.msk [vmem:[#allocation2 + $0x40] sm:$0xff] %vm650, %v642
        %660 = vst.msk [vmem:[#allocation2 + $0x48] sm:$0xff] %vm650, %v643
        %661 = vst.msk [vmem:[#allocation2 + $0x50] sm:$0xff] %vm650, %v644
        %662 = vst.msk [vmem:[#allocation2 + $0x58] sm:$0xff] %vm650, %v645
        %663 = vst.msk [vmem:[#allocation2 + $0x60] sm:$0xff] %vm650, %v646
        %664 = vst.msk [vmem:[#allocation2 + $0x68] sm:$0xff] %vm650, %v647
        %665 = vst.msk [vmem:[#allocation2 + $0x70] sm:$0xff] %vm650, %v648
        %666 = vst.msk [vmem:[#allocation2 + $0x78] sm:$0xff] %vm650, %v649
        %v667 = vld [vmem:[#allocation3] sm:$0xff]
        %v668 = vld [vmem:[#allocation3 + $0x8] sm:$0xff]
        %v669 = vld [vmem:[#allocation3 + $0x10] sm:$0xff]
        %v670 = vld [vmem:[#allocation3 + $0x18] sm:$0xff]
        %v671 = vld [vmem:[#allocation3 + $0x20] sm:$0xff]
        %v672 = vld [vmem:[#allocation3 + $0x28] sm:$0xff]
        %v673 = vld [vmem:[#allocation3 + $0x30] sm:$0xff]
        %v674 = vld [vmem:[#allocation3 + $0x38] sm:$0xff]
        %v675 = vld [vmem:[#allocation3 + $0x40] sm:$0xff]
        %v676 = vld [vmem:[#allocation3 + $0x48] sm:$0xff]
        %v677 = vld [vmem:[#allocation3 + $0x50] sm:$0xff]
        %v678 = vld [vmem:[#allocation3 + $0x58] sm:$0xff]
        %v679 = vld [vmem:[#allocation3 + $0x60] sm:$0xff]
        %v680 = vld [vmem:[#allocation3 + $0x68] sm:$0xff]
        %v681 = vld [vmem:[#allocation3 + $0x70] sm:$0xff]
        %v682 = vld [vmem:[#allocation3 + $0x78] sm:$0xff]
        %683 = vadd.xlane.f32.xlu0 %v441
        %v684 = vpop.xlane.xlu0 %683
        %685 = vadd.xlane.f32.xlu0 %v442
        %v686 = vpop.xlane.xlu0 %685
        %687 = vadd.xlane.f32.xlu0 %v443
        %v688 = vpop.xlane.xlu0 %687
        %689 = vadd.xlane.f32.xlu0 %v444
        %v690 = vpop.xlane.xlu0 %689
        %691 = vadd.xlane.f32.xlu0 %v445
        %v692 = vpop.xlane.xlu0 %691
        %693 = vadd.xlane.f32.xlu0 %v446
        %v694 = vpop.xlane.xlu0 %693
        %695 = vadd.xlane.f32.xlu0 %v447
        %v696 = vpop.xlane.xlu0 %695
        %697 = vadd.xlane.f32.xlu0 %v448
        %v698 = vpop.xlane.xlu0 %697
        %699 = vadd.xlane.f32.xlu0 %v449
        %v700 = vpop.xlane.xlu0 %699
        %701 = vadd.xlane.f32.xlu0 %v450
        %v702 = vpop.xlane.xlu0 %701
        %703 = vadd.xlane.f32.xlu0 %v451
        %v704 = vpop.xlane.xlu0 %703
        %705 = vadd.xlane.f32.xlu0 %v452
        %v706 = vpop.xlane.xlu0 %705
        %707 = vadd.xlane.f32.xlu0 %v453
        %v708 = vpop.xlane.xlu0 %707
        %709 = vadd.xlane.f32.xlu0 %v454
        %v710 = vpop.xlane.xlu0 %709
        %711 = vadd.xlane.f32.xlu0 %v455
        %v712 = vpop.xlane.xlu0 %711
        %713 = vadd.xlane.f32.xlu0 %v456
        %v714 = vpop.xlane.xlu0 %713
        %v715 = vadd.f32 %v667, %v684
        %v716 = vadd.f32 %v668, %v686
        %v717 = vadd.f32 %v669, %v688
        %v718 = vadd.f32 %v670, %v690
        %v719 = vadd.f32 %v671, %v692
        %v720 = vadd.f32 %v672, %v694
        %v721 = vadd.f32 %v673, %v696
        %v722 = vadd.f32 %v674, %v698
        %v723 = vadd.f32 %v675, %v700
        %v724 = vadd.f32 %v676, %v702
        %v725 = vadd.f32 %v677, %v704
        %v726 = vadd.f32 %v678, %v706
        %v727 = vadd.f32 %v679, %v708
        %v728 = vadd.f32 %v680, %v710
        %v729 = vadd.f32 %v681, %v712
        %v730 = vadd.f32 %v682, %v714
        %vm731 = vcmask 7168
        %732 = vst.msk [vmem:[#allocation3] sm:$0xff] %vm731, %v715
        %733 = vst.msk [vmem:[#allocation3 + $0x8] sm:$0xff] %vm731, %v716
        %734 = vst.msk [vmem:[#allocation3 + $0x10] sm:$0xff] %vm731, %v717
        %735 = vst.msk [vmem:[#allocation3 + $0x18] sm:$0xff] %vm731, %v718
        %736 = vst.msk [vmem:[#allocation3 + $0x20] sm:$0xff] %vm731, %v719
        %737 = vst.msk [vmem:[#allocation3 + $0x28] sm:$0xff] %vm731, %v720
        %738 = vst.msk [vmem:[#allocation3 + $0x30] sm:$0xff] %vm731, %v721
        %739 = vst.msk [vmem:[#allocation3 + $0x38] sm:$0xff] %vm731, %v722
        %740 = vst.msk [vmem:[#allocation3 + $0x40] sm:$0xff] %vm731, %v723
        %741 = vst.msk [vmem:[#allocation3 + $0x48] sm:$0xff] %vm731, %v724
        %742 = vst.msk [vmem:[#allocation3 + $0x50] sm:$0xff] %vm731, %v725
        %743 = vst.msk [vmem:[#allocation3 + $0x58] sm:$0xff] %vm731, %v726
        %744 = vst.msk [vmem:[#allocation3 + $0x60] sm:$0xff] %vm731, %v727
        %745 = vst.msk [vmem:[#allocation3 + $0x68] sm:$0xff] %vm731, %v728
        %746 = vst.msk [vmem:[#allocation3 + $0x70] sm:$0xff] %vm731, %v729
        %747 = vst.msk [vmem:[#allocation3 + $0x78] sm:$0xff] %vm731, %v730
        %p748 = scmp.eq.s32.totalorder %s24, 2
        // Predicated region
        $region86: #{tpu_custom_call.1} parent=76 // pred_check
          %p749 = pneg %p748
        $region87: #{tpu_custom_call.1} parent=76 // pred_check_branch
          %751 = sbr.rel (%p749) target = $region89
        $region88: #{tpu_custom_call.1} parent=76 // pred_region
          %v752 = vld [vmem:[#allocation3] sm:$0xff]
          %v753 = vld [vmem:[#allocation3 + $0x8] sm:$0xff]
          %v754 = vld [vmem:[#allocation3 + $0x10] sm:$0xff]
          %v755 = vld [vmem:[#allocation3 + $0x18] sm:$0xff]
          %v756 = vld [vmem:[#allocation3 + $0x20] sm:$0xff]
          %v757 = vld [vmem:[#allocation3 + $0x28] sm:$0xff]
          %v758 = vld [vmem:[#allocation3 + $0x30] sm:$0xff]
          %v759 = vld [vmem:[#allocation3 + $0x38] sm:$0xff]
          %v760 = vld [vmem:[#allocation3 + $0x40] sm:$0xff]
          %v761 = vld [vmem:[#allocation3 + $0x48] sm:$0xff]
          %v762 = vld [vmem:[#allocation3 + $0x50] sm:$0xff]
          %v763 = vld [vmem:[#allocation3 + $0x58] sm:$0xff]
          %v764 = vld [vmem:[#allocation3 + $0x60] sm:$0xff]
          %v765 = vld [vmem:[#allocation3 + $0x68] sm:$0xff]
          %v766 = vld [vmem:[#allocation3 + $0x70] sm:$0xff]
          %v767 = vld [vmem:[#allocation3 + $0x78] sm:$0xff]
          %v768 = vmax.f32 %v752, 1.0
          %v769 = vmax.f32 %v753, 1.0
          %v770 = vmax.f32 %v754, 1.0
          %v771 = vmax.f32 %v755, 1.0
          %v772 = vmax.f32 %v756, 1.0
          %v773 = vmax.f32 %v757, 1.0
          %v774 = vmax.f32 %v758, 1.0
          %v775 = vmax.f32 %v759, 1.0
          %v776 = vmax.f32 %v760, 1.0
          %v777 = vmax.f32 %v761, 1.0
          %v778 = vmax.f32 %v762, 1.0
          %v779 = vmax.f32 %v763, 1.0
          %v780 = vmax.f32 %v764, 1.0
          %v781 = vmax.f32 %v765, 1.0
          %v782 = vmax.f32 %v766, 1.0
          %v783 = vmax.f32 %v767, 1.0
          %v784 = vrcp.pop %v768
          %v785 = vrcp.pop %v769
          %v786 = vrcp.pop %v770
          %v787 = vrcp.pop %v771
          %v788 = vrcp.pop %v772
          %v789 = vrcp.pop %v773
          %v790 = vrcp.pop %v774
          %v791 = vrcp.pop %v775
          %v792 = vrcp.pop %v776
          %v793 = vrcp.pop %v777
          %v794 = vrcp.pop %v778
          %v795 = vrcp.pop %v779
          %v796 = vrcp.pop %v780
          %v797 = vrcp.pop %v781
          %v798 = vrcp.pop %v782
          %v799 = vrcp.pop %v783
          %vm800 = vcmp.gt.f32.partialorder %v752, 0.0
          %vm801 = vcmp.gt.f32.partialorder %v753, 0.0
          %vm802 = vcmp.gt.f32.partialorder %v754, 0.0
          %vm803 = vcmp.gt.f32.partialorder %v755, 0.0
          %vm804 = vcmp.gt.f32.partialorder %v756, 0.0
          %vm805 = vcmp.gt.f32.partialorder %v757, 0.0
          %vm806 = vcmp.gt.f32.partialorder %v758, 0.0
          %vm807 = vcmp.gt.f32.partialorder %v759, 0.0
          %vm808 = vcmp.gt.f32.partialorder %v760, 0.0
          %vm809 = vcmp.gt.f32.partialorder %v761, 0.0
          %vm810 = vcmp.gt.f32.partialorder %v762, 0.0
          %vm811 = vcmp.gt.f32.partialorder %v763, 0.0
          %vm812 = vcmp.gt.f32.partialorder %v764, 0.0
          %vm813 = vcmp.gt.f32.partialorder %v765, 0.0
          %vm814 = vcmp.gt.f32.partialorder %v766, 0.0
          %vm815 = vcmp.gt.f32.partialorder %v767, 0.0
          %v816 = vld [vmem:[#allocation2] sm:$0xff]
          %v817 = vld [vmem:[#allocation2 + $0x8] sm:$0xff]
          %v818 = vld [vmem:[#allocation2 + $0x10] sm:$0xff]
          %v819 = vld [vmem:[#allocation2 + $0x18] sm:$0xff]
          %v820 = vld [vmem:[#allocation2 + $0x20] sm:$0xff]
          %v821 = vld [vmem:[#allocation2 + $0x28] sm:$0xff]
          %v822 = vld [vmem:[#allocation2 + $0x30] sm:$0xff]
          %v823 = vld [vmem:[#allocation2 + $0x38] sm:$0xff]
          %v824 = vld [vmem:[#allocation2 + $0x40] sm:$0xff]
          %v825 = vld [vmem:[#allocation2 + $0x48] sm:$0xff]
          %v826 = vld [vmem:[#allocation2 + $0x50] sm:$0xff]
          %v827 = vld [vmem:[#allocation2 + $0x58] sm:$0xff]
          %v828 = vld [vmem:[#allocation2 + $0x60] sm:$0xff]
          %v829 = vld [vmem:[#allocation2 + $0x68] sm:$0xff]
          %v830 = vld [vmem:[#allocation2 + $0x70] sm:$0xff]
          %v831 = vld [vmem:[#allocation2 + $0x78] sm:$0xff]
          %833 = vset.pattern.permute.xlu0 0
          %834 = vperm.xlu0 %833, %v784
          %v835 = vpop.permute.xlu0 %834
          %838 = vset.pattern.permute.xlu0 0
          %839 = vperm.xlu0 %838, %v785
          %v840 = vpop.permute.xlu0 %839
          %843 = vset.pattern.permute.xlu0 0
          %844 = vperm.xlu0 %843, %v786
          %v845 = vpop.permute.xlu0 %844
          %848 = vset.pattern.permute.xlu0 0
          %849 = vperm.xlu0 %848, %v787
          %v850 = vpop.permute.xlu0 %849
          %853 = vset.pattern.permute.xlu0 0
          %854 = vperm.xlu0 %853, %v788
          %v855 = vpop.permute.xlu0 %854
          %858 = vset.pattern.permute.xlu0 0
          %859 = vperm.xlu0 %858, %v789
          %v860 = vpop.permute.xlu0 %859
          %863 = vset.pattern.permute.xlu0 0
          %864 = vperm.xlu0 %863, %v790
          %v865 = vpop.permute.xlu0 %864
          %868 = vset.pattern.permute.xlu0 0
          %869 = vperm.xlu0 %868, %v791
          %v870 = vpop.permute.xlu0 %869
          %873 = vset.pattern.permute.xlu0 0
          %874 = vperm.xlu0 %873, %v792
          %v875 = vpop.permute.xlu0 %874
          %878 = vset.pattern.permute.xlu0 0
          %879 = vperm.xlu0 %878, %v793
          %v880 = vpop.permute.xlu0 %879
          %883 = vset.pattern.permute.xlu0 0
          %884 = vperm.xlu0 %883, %v794
          %v885 = vpop.permute.xlu0 %884
          %888 = vset.pattern.permute.xlu0 0
          %889 = vperm.xlu0 %888, %v795
          %v890 = vpop.permute.xlu0 %889
          %893 = vset.pattern.permute.xlu0 0
          %894 = vperm.xlu0 %893, %v796
          %v895 = vpop.permute.xlu0 %894
          %898 = vset.pattern.permute.xlu0 0
          %899 = vperm.xlu0 %898, %v797
          %v900 = vpop.permute.xlu0 %899
          %903 = vset.pattern.permute.xlu0 0
          %904 = vperm.xlu0 %903, %v798
          %v905 = vpop.permute.xlu0 %904
          %908 = vset.pattern.permute.xlu0 0
          %909 = vperm.xlu0 %908, %v799
          %v910 = vpop.permute.xlu0 %909
          %v912 = vmul.f32 %v816, %v835
          %v913 = vmul.f32 %v817, %v840
          %v914 = vmul.f32 %v818, %v845
          %v915 = vmul.f32 %v819, %v850
          %v916 = vmul.f32 %v820, %v855
          %v917 = vmul.f32 %v821, %v860
          %v918 = vmul.f32 %v822, %v865
          %v919 = vmul.f32 %v823, %v870
          %v920 = vmul.f32 %v824, %v875
          %v921 = vmul.f32 %v825, %v880
          %v922 = vmul.f32 %v826, %v885
          %v923 = vmul.f32 %v827, %v890
          %v924 = vmul.f32 %v828, %v895
          %v925 = vmul.f32 %v829, %v900
          %v926 = vmul.f32 %v830, %v905
          %v927 = vmul.f32 %v831, %v910
          %v928 = vld [vmem:[%s384] sm:$0xff]
          %v929 = vld [vmem:[%s384 + $0x8] sm:$0xff]
          %v930 = vld [vmem:[%s384 + $0x10] sm:$0xff]
          %v931 = vld [vmem:[%s384 + $0x18] sm:$0xff]
          %v932 = vld [vmem:[%s384 + $0x20] sm:$0xff]
          %v933 = vld [vmem:[%s384 + $0x28] sm:$0xff]
          %v934 = vld [vmem:[%s384 + $0x30] sm:$0xff]
          %v935 = vld [vmem:[%s384 + $0x38] sm:$0xff]
          %v936 = vld [vmem:[%s384 + $0x40] sm:$0xff]
          %v937 = vld [vmem:[%s384 + $0x48] sm:$0xff]
          %v938 = vld [vmem:[%s384 + $0x50] sm:$0xff]
          %v939 = vld [vmem:[%s384 + $0x58] sm:$0xff]
          %v940 = vld [vmem:[%s384 + $0x60] sm:$0xff]
          %v941 = vld [vmem:[%s384 + $0x68] sm:$0xff]
          %v942 = vld [vmem:[%s384 + $0x70] sm:$0xff]
          %v943 = vld [vmem:[%s384 + $0x78] sm:$0xff]
          %v944 = vsel %vm800, 1, 0
          %v945 = vsel %vm801, 1, 0
          %v946 = vsel %vm802, 1, 0
          %v947 = vsel %vm803, 1, 0
          %v948 = vsel %vm804, 1, 0
          %v949 = vsel %vm805, 1, 0
          %v950 = vsel %vm806, 1, 0
          %v951 = vsel %vm807, 1, 0
          %v952 = vsel %vm808, 1, 0
          %v953 = vsel %vm809, 1, 0
          %v954 = vsel %vm810, 1, 0
          %v955 = vsel %vm811, 1, 0
          %v956 = vsel %vm812, 1, 0
          %v957 = vsel %vm813, 1, 0
          %v958 = vsel %vm814, 1, 0
          %v959 = vsel %vm815, 1, 0
          %960 = vset.pattern.permute.xlu0 0
          %961 = vperm.xlu0 %960, %v944
          %v962 = vpop.permute.xlu0 %961
          %963 = vset.pattern.permute.xlu0 0
          %964 = vperm.xlu0 %963, %v945
          %v965 = vpop.permute.xlu0 %964
          %966 = vset.pattern.permute.xlu0 0
          %967 = vperm.xlu0 %966, %v946
          %v968 = vpop.permute.xlu0 %967
          %969 = vset.pattern.permute.xlu0 0
          %970 = vperm.xlu0 %969, %v947
          %v971 = vpop.permute.xlu0 %970
          %972 = vset.pattern.permute.xlu0 0
          %973 = vperm.xlu0 %972, %v948
          %v974 = vpop.permute.xlu0 %973
          %975 = vset.pattern.permute.xlu0 0
          %976 = vperm.xlu0 %975, %v949
          %v977 = vpop.permute.xlu0 %976
          %978 = vset.pattern.permute.xlu0 0
          %979 = vperm.xlu0 %978, %v950
          %v980 = vpop.permute.xlu0 %979
          %981 = vset.pattern.permute.xlu0 0
          %982 = vperm.xlu0 %981, %v951
          %v983 = vpop.permute.xlu0 %982
          %984 = vset.pattern.permute.xlu0 0
          %985 = vperm.xlu0 %984, %v952
          %v986 = vpop.permute.xlu0 %985
          %987 = vset.pattern.permute.xlu0 0
          %988 = vperm.xlu0 %987, %v953
          %v989 = vpop.permute.xlu0 %988
          %990 = vset.pattern.permute.xlu0 0
          %991 = vperm.xlu0 %990, %v954
          %v992 = vpop.permute.xlu0 %991
          %993 = vset.pattern.permute.xlu0 0
          %994 = vperm.xlu0 %993, %v955
          %v995 = vpop.permute.xlu0 %994
          %996 = vset.pattern.permute.xlu0 0
          %997 = vperm.xlu0 %996, %v956
          %v998 = vpop.permute.xlu0 %997
          %999 = vset.pattern.permute.xlu0 0
          %1000 = vperm.xlu0 %999, %v957
          %v1001 = vpop.permute.xlu0 %1000
          %1002 = vset.pattern.permute.xlu0 0
          %1003 = vperm.xlu0 %1002, %v958
          %v1004 = vpop.permute.xlu0 %1003
          %1005 = vset.pattern.permute.xlu0 0
          %1006 = vperm.xlu0 %1005, %v959
          %v1007 = vpop.permute.xlu0 %1006
          %vm1008 = vcmp.eq.s32.totalorder %v962, 1
          %vm1009 = vcmp.eq.s32.totalorder %v965, 1
          %vm1010 = vcmp.eq.s32.totalorder %v968, 1
          %vm1011 = vcmp.eq.s32.totalorder %v971, 1
          %vm1012 = vcmp.eq.s32.totalorder %v974, 1
          %vm1013 = vcmp.eq.s32.totalorder %v977, 1
          %vm1014 = vcmp.eq.s32.totalorder %v980, 1
          %vm1015 = vcmp.eq.s32.totalorder %v983, 1
          %vm1016 = vcmp.eq.s32.totalorder %v986, 1
          %vm1017 = vcmp.eq.s32.totalorder %v989, 1
          %vm1018 = vcmp.eq.s32.totalorder %v992, 1
          %vm1019 = vcmp.eq.s32.totalorder %v995, 1
          %vm1020 = vcmp.eq.s32.totalorder %v998, 1
          %vm1021 = vcmp.eq.s32.totalorder %v1001, 1
          %vm1022 = vcmp.eq.s32.totalorder %v1004, 1
          %vm1023 = vcmp.eq.s32.totalorder %v1007, 1
          %v1024 = vsel %vm1008, %v912, %v928
          %v1025 = vsel %vm1009, %v913, %v929
          %v1026 = vsel %vm1010, %v914, %v930
          %v1027 = vsel %vm1011, %v915, %v931
          %v1028 = vsel %vm1012, %v916, %v932
          %v1029 = vsel %vm1013, %v917, %v933
          %v1030 = vsel %vm1014, %v918, %v934
          %v1031 = vsel %vm1015, %v919, %v935
          %v1032 = vsel %vm1016, %v920, %v936
          %v1033 = vsel %vm1017, %v921, %v937
          %v1034 = vsel %vm1018, %v922, %v938
          %v1035 = vsel %vm1019, %v923, %v939
          %v1036 = vsel %vm1020, %v924, %v940
          %v1037 = vsel %vm1021, %v925, %v941
          %v1038 = vsel %vm1022, %v926, %v942
          %v1039 = vsel %vm1023, %v927, %v943
          %v1040 = vld [vmem:[%s3] sm:$0xff]
          %v1041 = vld [vmem:[%s3 + $0x8] sm:$0xff]
          %v1042 = vld [vmem:[%s3 + $0x10] sm:$0xff]
          %v1043 = vld [vmem:[%s3 + $0x18] sm:$0xff]
          %v1044 = vld [vmem:[%s3 + $0x20] sm:$0xff]
          %v1045 = vld [vmem:[%s3 + $0x28] sm:$0xff]
          %v1046 = vld [vmem:[%s3 + $0x30] sm:$0xff]
          %v1047 = vld [vmem:[%s3 + $0x38] sm:$0xff]
          %v1048 = vld [vmem:[%s4] sm:$0x1]
          %v1050 = vlaneseq
          %v1051 = vshrl.u32 %v1050, 7
          %v1052 = vsub.s32 0, %v1051
          %v1053 = vrot.slane %v1048, %v1052
          %v1056 = vsel %vm650, %v1024, 0
          %v1059 = vsel %vm650, %v1025, 0
          %v1062 = vsel %vm650, %v1026, 0
          %v1065 = vsel %vm650, %v1027, 0
          %v1068 = vsel %vm650, %v1028, 0
          %v1071 = vsel %vm650, %v1029, 0
          %v1074 = vsel %vm650, %v1030, 0
          %v1077 = vsel %vm650, %v1031, 0
          %v1080 = vsel %vm650, %v1032, 0
          %v1083 = vsel %vm650, %v1033, 0
          %v1086 = vsel %vm650, %v1034, 0
          %v1089 = vsel %vm650, %v1035, 0
          %v1092 = vsel %vm650, %v1036, 0
          %v1095 = vsel %vm650, %v1037, 0
          %v1098 = vsel %vm650, %v1038, 0
          %v1101 = vsel %vm650, %v1039, 0
          %1103 = vmatprep.subr.mxu0 0.0
          %1104 = vmatpush1.msra.mxu0 %v1040
          %1105 = vmatprep.subr.mxu0 0.0
          %1106 = vmatpush1.msra.mxu0 %v1041
          %1107 = vmatprep.subr.mxu0 0.0
          %1108 = vmatpush1.msra.mxu0 %v1042
          %1109 = vmatprep.subr.mxu0 0.0
          %1110 = vmatpush1.msra.mxu0 %v1043
          %1111 = vmatprep.subr.mxu0 0.0
          %1112 = vmatpush1.msra.mxu0 %v1044
          %1113 = vmatprep.subr.mxu0 0.0
          %1114 = vmatpush1.msra.mxu0 %v1045
          %1115 = vmatprep.subr.mxu0 0.0
          %1116 = vmatpush1.msra.mxu0 %v1046
          %1117 = vmatprep.subr.mxu0 0.0
          %1118 = vmatpush1.msra.mxu0 %v1047
          %1119 = vmatprep.subr.mxu0 0.0
          %1120 = vmatpush1.msra.mxu0 0.0
          %1121 = vmatprep.subr.mxu0 0.0
          %1122 = vmatpush1.msra.mxu0 0.0
          %1123 = vmatprep.subr.mxu0 0.0
          %1124 = vmatpush1.msra.mxu0 0.0
          %1125 = vmatprep.subr.mxu0 0.0
          %1126 = vmatpush1.msra.mxu0 0.0
          %1127 = vmatprep.subr.mxu0 0.0
          %1128 = vmatpush1.msra.mxu0 0.0
          %1129 = vmatprep.subr.mxu0 0.0
          %1130 = vmatpush1.msra.mxu0 0.0
          %1131 = vmatprep.subr.mxu0 0.0
          %1132 = vmatpush1.msra.mxu0 0.0
          %1133 = vmatprep.subr.mxu0 0.0
          %1134 = vmatpush1.msra.mxu0 0.0
          %1135 = vmatprep.subr.mxu0 0.0
          %1136 = vmatpush1.msra.mxu0 0.0
          %1137 = vmatprep.subr.mxu0 0.0
          %1138 = vmatpush1.msra.mxu0 0.0
          %1139 = vmatprep.subr.mxu0 0.0
          %1140 = vmatpush1.msra.mxu0 0.0
          %1141 = vmatprep.subr.mxu0 0.0
          %1142 = vmatpush1.msra.mxu0 0.0
          %1143 = vmatprep.subr.mxu0 0.0
          %1144 = vmatpush1.msra.mxu0 0.0
          %1145 = vmatprep.subr.mxu0 0.0
          %1146 = vmatpush1.msra.mxu0 0.0
          %1147 = vmatprep.subr.mxu0 0.0
          %1148 = vmatpush1.msra.mxu0 0.0
          %1149 = vmatprep.subr.mxu0 0.0
          %1150 = vmatpush1.msra.mxu0 0.0
          %1151 = vmatprep.subr.mxu0 0.0
          %1152 = vmatpush1.msra.mxu0 0.0
          %1153 = vmatprep.subr.mxu0 0.0
          %1154 = vmatpush1.msra.mxu0 0.0
          %1155 = vmatprep.subr.mxu0 0.0
          %1156 = vmatpush1.msra.mxu0 0.0
          %1157 = vmatprep.subr.mxu0 0.0
          %1158 = vmatpush1.msra.mxu0 0.0
          %1159 = vmatprep.subr.mxu0 0.0
          %1160 = vmatpush1.msra.mxu0 0.0
          %1161 = vmatprep.subr.mxu0 0.0
          %1162 = vmatpush1.msra.mxu0 0.0
          %1163 = vmatprep.subr.mxu0 0.0
          %1164 = vmatpush1.msra.mxu0 0.0
          %1165 = vmatprep.subr.mxu0 0.0
          %1166 = vmatpush1.msra.mxu0 0.0
          %1167 = vmatprep.mubr.f32.mxu0 0.0
          %1168 = vmatmul.mubr.f32.gmra.mrb[0].mxu0 %v1056
          %v1169 = vpop.f32.mrb[0].mxu0
          %v1170 = vadd.f32 %v1053, %v1169
          %v1171 = vpop.f32.mrb[0].mxu0
          %1172 = vmatprep.mubr.f32.mxu0 0.0
          %1173 = vmatmul.mubr.f32.gmra.mrb[0].mxu0 %v1059
          %v1174 = vpop.f32.mrb[0].mxu0
          %v1175 = vadd.f32 %v1053, %v1174
          %v1176 = vpop.f32.mrb[0].mxu0
          %1177 = vmatprep.mubr.f32.mxu0 0.0
          %1178 = vmatmul.mubr.f32.gmra.mrb[0].mxu0 %v1062
          %v1179 = vpop.f32.mrb[0].mxu0
          %v1180 = vadd.f32 %v1053, %v1179
          %v1181 = vpop.f32.mrb[0].mxu0
          %1182 = vmatprep.mubr.f32.mxu0 0.0
          %1183 = vmatmul.mubr.f32.gmra.mrb[0].mxu0 %v1065
          %v1184 = vpop.f32.mrb[0].mxu0
          %v1185 = vadd.f32 %v1053, %v1184
          %v1186 = vpop.f32.mrb[0].mxu0
          %1187 = vmatprep.mubr.f32.mxu0 0.0
          %1188 = vmatmul.mubr.f32.gmra.mrb[0].mxu0 %v1068
          %v1189 = vpop.f32.mrb[0].mxu0
          %v1190 = vadd.f32 %v1053, %v1189
          %v1191 = vpop.f32.mrb[0].mxu0
          %1192 = vmatprep.mubr.f32.mxu0 0.0
          %1193 = vmatmul.mubr.f32.gmra.mrb[0].mxu0 %v1071
          %v1194 = vpop.f32.mrb[0].mxu0
          %v1195 = vadd.f32 %v1053, %v1194
          %v1196 = vpop.f32.mrb[0].mxu0
          %1197 = vmatprep.mubr.f32.mxu0 0.0
          %1198 = vmatmul.mubr.f32.gmra.mrb[0].mxu0 %v1074
          %v1199 = vpop.f32.mrb[0].mxu0
          %v1200 = vadd.f32 %v1053, %v1199
          %v1201 = vpop.f32.mrb[0].mxu0
          %1202 = vmatprep.mubr.f32.mxu0 0.0
          %1203 = vmatmul.mubr.f32.gmra.mrb[0].mxu0 %v1077
          %v1204 = vpop.f32.mrb[0].mxu0
          %v1205 = vadd.f32 %v1053, %v1204
          %v1206 = vpop.f32.mrb[0].mxu0
          %1207 = vmatprep.mubr.f32.mxu0 0.0
          %1208 = vmatmul.mubr.f32.gmra.mrb[0].mxu0 %v1080
          %v1209 = vpop.f32.mrb[0].mxu0
          %v1210 = vadd.f32 %v1053, %v1209
          %v1211 = vpop.f32.mrb[0].mxu0
          %1212 = vmatprep.mubr.f32.mxu0 0.0
          %1213 = vmatmul.mubr.f32.gmra.mrb[0].mxu0 %v1083
          %v1214 = vpop.f32.mrb[0].mxu0
          %v1215 = vadd.f32 %v1053, %v1214
          %v1216 = vpop.f32.mrb[0].mxu0
          %1217 = vmatprep.mubr.f32.mxu0 0.0
          %1218 = vmatmul.mubr.f32.gmra.mrb[0].mxu0 %v1086
          %v1219 = vpop.f32.mrb[0].mxu0
          %v1220 = vadd.f32 %v1053, %v1219
          %v1221 = vpop.f32.mrb[0].mxu0
          %1222 = vmatprep.mubr.f32.mxu0 0.0
          %1223 = vmatmul.mubr.f32.gmra.mrb[0].mxu0 %v1089
          %v1224 = vpop.f32.mrb[0].mxu0
          %v1225 = vadd.f32 %v1053, %v1224
          %v1226 = vpop.f32.mrb[0].mxu0
          %1227 = vmatprep.mubr.f32.mxu0 0.0
          %1228 = vmatmul.mubr.f32.gmra.mrb[0].mxu0 %v1092
          %v1229 = vpop.f32.mrb[0].mxu0
          %v1230 = vadd.f32 %v1053, %v1229
          %v1231 = vpop.f32.mrb[0].mxu0
          %1232 = vmatprep.mubr.f32.mxu0 0.0
          %1233 = vmatmul.mubr.f32.gmra.mrb[0].mxu0 %v1095
          %v1234 = vpop.f32.mrb[0].mxu0
          %v1235 = vadd.f32 %v1053, %v1234
          %v1236 = vpop.f32.mrb[0].mxu0
          %1237 = vmatprep.mubr.f32.mxu0 0.0
          %1238 = vmatmul.mubr.f32.gmra.mrb[0].mxu0 %v1098
          %v1239 = vpop.f32.mrb[0].mxu0
          %v1240 = vadd.f32 %v1053, %v1239
          %v1241 = vpop.f32.mrb[0].mxu0
          %1242 = vmatprep.mubr.f32.mxu0 0.0
          %1243 = vmatmul.mubr.f32.gmra.mrb[0].mxu0 %v1101
          %v1244 = vpop.f32.mrb[0].mxu0
          %v1245 = vadd.f32 %v1053, %v1244
          %v1246 = vpop.f32.mrb[0].mxu0
          %1247 = vdwg.mxu0
          %v1248 = vmax.f32 %v1170, 0.0
          %v1249 = vmax.f32 %v1175, 0.0
          %v1250 = vmax.f32 %v1180, 0.0
          %v1251 = vmax.f32 %v1185, 0.0
          %v1252 = vmax.f32 %v1190, 0.0
          %v1253 = vmax.f32 %v1195, 0.0
          %v1254 = vmax.f32 %v1200, 0.0
          %v1255 = vmax.f32 %v1205, 0.0
          %v1256 = vmax.f32 %v1210, 0.0
          %v1257 = vmax.f32 %v1215, 0.0
          %v1258 = vmax.f32 %v1220, 0.0
          %v1259 = vmax.f32 %v1225, 0.0
          %v1260 = vmax.f32 %v1230, 0.0
          %v1261 = vmax.f32 %v1235, 0.0
          %v1262 = vmax.f32 %v1240, 0.0
          %v1263 = vmax.f32 %v1245, 0.0
          %1264 = vst [vmem:[%s372] sm:$0xff] %v1248
          %1265 = vst [vmem:[%s372 + $0x8] sm:$0xff] %v1249
          %1266 = vst [vmem:[%s372 + $0x10] sm:$0xff] %v1250
          %1267 = vst [vmem:[%s372 + $0x18] sm:$0xff] %v1251
          %1268 = vst [vmem:[%s372 + $0x20] sm:$0xff] %v1252
          %1269 = vst [vmem:[%s372 + $0x28] sm:$0xff] %v1253
          %1270 = vst [vmem:[%s372 + $0x30] sm:$0xff] %v1254
          %1271 = vst [vmem:[%s372 + $0x38] sm:$0xff] %v1255
          %1272 = vst [vmem:[%s372 + $0x40] sm:$0xff] %v1256
          %1273 = vst [vmem:[%s372 + $0x48] sm:$0xff] %v1257
          %1274 = vst [vmem:[%s372 + $0x50] sm:$0xff] %v1258
          %1275 = vst [vmem:[%s372 + $0x58] sm:$0xff] %v1259
          %1276 = vst [vmem:[%s372 + $0x60] sm:$0xff] %v1260
          %1277 = vst [vmem:[%s372 + $0x68] sm:$0xff] %v1261
          %1278 = vst [vmem:[%s372 + $0x70] sm:$0xff] %v1262
          %1279 = vst [vmem:[%s372 + $0x78] sm:$0xff] %v1263
        $region89: #{tpu_custom_call.1} parent=76 // pred_fallthru
          _
        %s1280 = sand.u32 %s161, 1
        %s1281 = scalar_lea.sflag [#allocation6], %s1280
        %s1282 = sand.u32 %s161, 1
        %s1283 = smul.addr %s1282, 128
        %s1284 = scalar_lea.vmem [#allocation5], %s1283
        // Predicated region
        $region90: #{tpu_custom_call.1} parent=76 // pred_check
          %p1285 = pneg %p171
        $region91: #{tpu_custom_call.1} parent=76 // pred_check_branch
          %1287 = sbr.rel (%p1285) target = $region93
        $region92: #{tpu_custom_call.1} parent=76 // pred_region
          %s1288 = smul.u32 16, %s23
          %s1290 = ssub.s32 2048, 2048
          %1291 = vsyncadd %s1281, %s1290
          %s1292 = smul.addr %s1288, 128
          %s1293 = scalar_lea.hbm %s5, %s1292
          %s1294 = sshll.u32 %s1284, 4
          %s1295 = int_to_ptr.vmem [resolvable:$true] %s1294
          %1300 = dma.vmem_to_hbm [thread:$0]  %s1295, 2048, %s1293, %s1281, 128, 128, 8
        $region93: #{tpu_custom_call.1} parent=76 // pred_fallthru
          _
      $region77: #{tpu_custom_call.1} parent=5 // pred_fallthru
        _
      %p1301 = scmp.le.s32.totalorder 2, %s14
      // Predicated region
      $region94: #{tpu_custom_call.1} parent=5 // pred_check
        %p1302 = pneg %p1301
      $region95: #{tpu_custom_call.1} parent=5 // pred_check_branch
        %1304 = sbr.rel (%p1302) target = $region97
      $region96: #{tpu_custom_call.1} parent=5 // pred_region
        %s1305 = ssub.s32 %s14, 2
        // Predicated region
        $region98: #{tpu_custom_call.1} parent=96 // pred_check
          %p1306 = pneg %p177
        $region99: #{tpu_custom_call.1} parent=96 // pred_check_branch
          %1308 = sbr.rel (%p1306) target = $region101
        $region100: #{tpu_custom_call.1} parent=96 // pred_region
          %s1309 = sand.u32 %s162, 1
          %s1310 = scalar_lea.sflag [#allocation6], %s1309
          %s1311 = sand.u32 %s162, 1
          %s1312 = smul.addr %s1311, 128
          %s1313 = scalar_lea.vmem [#allocation5], %s1312
          %1314 = dma.done %s1310, 2048
        $region101: #{tpu_custom_call.1} parent=96 // pred_fallthru
          _
      $region97: #{tpu_custom_call.1} parent=5 // pred_fallthru
        _
    $region6: #{tpu_custom_call.1} parent=1 // loop_footer
      %s18 = sadd.s32 1, %s14
    $region7: #{tpu_custom_call.1} parent=1 // loop_footer_branch
      %13 = sbr.rel target = $region3
    $region8: #{tpu_custom_call.1} parent=1 // loop_exit
      _
    %1315 = vsyncpa [#allocation6], 1
    %s1316 = scalar_lea.sflag [#allocation6], 1
    %1317 = vsyncpa %s1316, 1

</llo_original>
